<compile_context>
chip_gen: v6e
topology: v6e:2x2x1
jax: 0.10.0
libtpu: 0.0.40
codegen_flags: <defaults>
</compile_context>

<pallas_src>
import numpy as np
import jax
import jax.numpy as jnp
from jax import lax
from jax.experimental import pallas as pl
from jax.experimental.pallas import tpu as pltpu

INPUT_SIZE = 1
HIDDEN_SIZE = 50
OUTPUT_SIZE = 1
HP = 128  # per-gate padded hidden width (vreg-lane aligned)


def _sigmoid_via_tanh(x):
    # logistic(x) == 0.5*tanh(0.5*x) + 0.5 : a single EUP tanh issue instead
    # of exp + reciprocal, cutting the serial per-step EUP chain.
    return 0.5 * jnp.tanh(0.5 * x) + 0.5


def lstm_fc_kernel(x_ref, w_ih_ref, w_hh_ref, b_ref, w_fc_ref, b_fc_ref,
                   out_ref, hist_ref):
    # x_ref:    (T, TB, I)      time-major input block
    # w_ih_ref: (I, 4*Hp)       input weights, gates concat on lanes, 0-padded
    # w_hh_ref: (Hp, 4*Hp)      fused recurrent weight, 0-padded
    # b_ref:    (1, 4*Hp)       bias_ih + bias_hh, 0-padded
    # w_fc_ref: (1, Hp)         fc weight row, 0-padded
    # b_fc_ref: (1, 1)          fc bias
    # out_ref:  (T, TB)         lane-dense output slab (O=1 squeezed)
    # hist_ref: (T, TB, Hp)     VMEM scratch: per-step hidden states
    T, TB, I = x_ref.shape
    Hp = w_hh_ref.shape[0]

    # Hoisted loads (constant over the whole time loop).
    w_hh_all = w_hh_ref[...]                         # (Hp, 4*Hp)
    w_ih_all = w_ih_ref[...]                         # (I, 4*Hp)
    b_row = b_ref[...]                               # (1, 4*Hp)

    h0 = jnp.zeros((TB, Hp), jnp.float32)
    c0 = jnp.zeros((TB, Hp), jnp.float32)

    def step(t, carry):
        h, c = carry
        # Input projection recomputed per step: it does not depend on h, so it
        # runs on the VPU in parallel with the recurrent matmul (no (T,TB,4Hp)
        # VMEM scratch, no write+read round trip).  INPUT_SIZE == 1 -> a
        # lane-broadcast multiply.
        x_t = x_ref[t]                               # (TB, I)
        pre = b_row
        for ii in range(I):                          # I == 1 here
            pre = pre + x_t[:, ii:ii + 1] * w_ih_all[ii:ii + 1, :]
        # Single fused recurrent MXU matmul per step: (TB, Hp) @ (Hp, 4*Hp).
        gates = (jnp.dot(h, w_hh_all, preferred_element_type=jnp.float32)
                 + pre)
        # Gate slices at 128-lane multiples -> whole-vreg slices, no rotates.
        i_g = _sigmoid_via_tanh(gates[:, 0 * Hp:1 * Hp])
        f_g = _sigmoid_via_tanh(gates[:, 1 * Hp:2 * Hp])
        g_g = jnp.tanh(gates[:, 2 * Hp:3 * Hp])
        o_g = _sigmoid_via_tanh(gates[:, 3 * Hp:4 * Hp])
        c_new = f_g * c + i_g * g_g
        h_new = o_g * jnp.tanh(c_new)
        hist_ref[t] = h_new                          # full (TB, Hp) store
        return (h_new, c_new)

    # Fully unroll only short fixed-length loops; bound the unroll for long T
    # so the 64-vreg file does not spill.
    unroll = True if T <= 16 else 8
    lax.fori_loop(0, T, step, (h0, c0), unroll=unroll)

    # Hoisted Linear(H -> 1): one multiply + lane reduction + ONE lane-dense
    # (T, TB) store instead of per-step width-1 masked stores.
    # (Padded lanes of h are exactly 0 and w_fc pad lanes are 0 -> no leakage.)
    # TODO(synk): for very long T on v7x (64 MiB VMEM) fold this reduction into
    # the step and drop hist_ref entirely (it is off the h critical path).
    h_all = hist_ref[...]                            # (T, TB, Hp)
    w_fc = w_fc_ref[...][None]                       # (1, 1, Hp)
    out = jnp.sum(h_all * w_fc, axis=-1) + b_fc_ref[...]   # (T, TB)
    out_ref[...] = out.astype(out_ref.dtype)


def lstm_model_forward(x, packed):
    """x: (B, T, INPUT) batch-first float32. Returns (B, T, OUTPUT)."""
    w_ih_all, w_hh_all, b_all, w_fc_row, b_fc = packed
    B, T, I = x.shape
    Hp = w_hh_all.shape[0]

    x_tm = jnp.transpose(x, (1, 0, 2))               # (T, B, I) time-major

    # Batch tile: keep the FULL batch in one block so each serial timestep's
    # matmul fills the MXU rows and the recurrence runs exactly once.  Only
    # split into blocks of 128 (>= 2 blocks, so v7x's two TensorCores both get
    # work) when B is large and 128-divisible (the lane-dense (T, TB) output
    # requires TB to be a multiple of 128 when it is not the full batch).
    if B >= 256 and B % 128 == 0:
        TB = 128
    else:
        TB = B
    grid = (B // TB,)

    grid_spec = pltpu.PrefetchScalarGridSpec(
        num_scalar_prefetch=0,
        grid=grid,
        in_specs=[
            pl.BlockSpec((T, TB, I), lambda b: (0, b, 0)),       # x
            pl.BlockSpec((I, 4 * Hp), lambda b: (0, 0)),         # W_ih_all
            pl.BlockSpec((Hp, 4 * Hp), lambda b: (0, 0)),        # W_hh_all
            pl.BlockSpec((1, 4 * Hp), lambda b: (0, 0)),         # bias
            pl.BlockSpec((1, Hp), lambda b: (0, 0)),             # fc weight row
            pl.BlockSpec((1, 1), lambda b: (0, 0)),              # fc bias
        ],
        out_specs=pl.BlockSpec((T, TB), lambda b: (0, b)),       # lane-dense
        scratch_shapes=[
            pltpu.VMEM((T, TB, Hp), jnp.float32),    # hidden-state history
        ],
    )

    out_tm = pl.pallas_call(
        lstm_fc_kernel,
        out_shape=jax.ShapeDtypeStruct((T, B), jnp.float32),
        grid_spec=grid_spec,
        compiler_params=pltpu.CompilerParams(
            dimension_semantics=("parallel",)),
    )(x_tm, w_ih_all, w_hh_all, b_all, w_fc_row, b_fc)

    # (T, B) -> (B, T, 1): restore the batch-first, O=1 layout in the wrapper.
    return jnp.transpose(out_tm, (1, 0))[..., None]


def lstm_model_ref(x, raw):
    """Pure-JAX reference matching PyTorch nn.LSTM + nn.Linear semantics."""
    weight_ih, weight_hh, bias_ih, bias_hh, fc_w, fc_b = raw
    H = weight_hh.shape[1]
    B, T, I = x.shape
    w_ih = weight_ih.reshape(4, H, I)
    w_hh = weight_hh.reshape(4, H, H)
    b = (bias_ih + bias_hh).reshape(4, H)

    def cell(carry, x_t):
        h, c = carry
        i = jax.nn.sigmoid(x_t @ w_ih[0].T + h @ w_hh[0].T + b[0])
        f = jax.nn.sigmoid(x_t @ w_ih[1].T + h @ w_hh[1].T + b[1])
        g = jnp.tanh(x_t @ w_ih[2].T + h @ w_hh[2].T + b[2])
        o = jax.nn.sigmoid(x_t @ w_ih[3].T + h @ w_hh[3].T + b[3])
        c = f * c + i * g
        h = o * jnp.tanh(c)
        return (h, c), h

    h0 = jnp.zeros((B, H), jnp.float32)
    c0 = jnp.zeros((B, H), jnp.float32)
    _, hs = lax.scan(cell, (h0, c0), jnp.transpose(x, (1, 0, 2)))  # (T, B, H)
    out = hs @ fc_w.T + fc_b                                       # (T, B, O)
    return jnp.transpose(out, (1, 0, 2))


def pack_params(raw, hidden_size, hp=HP):
    """Repack PyTorch-layout params for the kernel: per-gate zero-pad H->hp and
    concatenate the 4 gates (i, f, g, o) along the lane axis."""
    weight_ih, weight_hh, bias_ih, bias_hh, fc_w, fc_b = raw
    H = hidden_size
    I = weight_ih.shape[1]
    O = fc_w.shape[0]
    assert O == 1, "kernel FC path is specialized for output_size == 1"

    w_ih_g = jnp.transpose(weight_ih.reshape(4, H, I), (0, 2, 1))   # (4, I, H)
    w_hh_g = jnp.transpose(weight_hh.reshape(4, H, H), (0, 2, 1))   # (4, H, H)
    b_g = (bias_ih + bias_hh).reshape(4, H)

    w_ih_all = jnp.zeros((I, 4 * hp), jnp.float32)
    w_hh_all = jnp.zeros((hp, 4 * hp), jnp.float32)
    b_all = jnp.zeros((1, 4 * hp), jnp.float32)
    for g in range(4):
        w_ih_all = w_ih_all.at[:, g * hp:g * hp + H].set(w_ih_g[g])
        w_hh_all = w_hh_all.at[:H, g * hp:g * hp + H].set(w_hh_g[g])
        b_all = b_all.at[0, g * hp:g * hp + H].set(b_g[g])
    w_fc_row = jnp.zeros((1, hp), jnp.float32).at[0, :H].set(fc_w[0])
    b_fc = fc_b.reshape(1, O).astype(jnp.float32)
    return (w_ih_all, w_hh_all, b_all, w_fc_row, b_fc)


def init_params(key, input_size, hidden_size, output_size):
    """PyTorch-style uniform(-1/sqrt(H), 1/sqrt(H)) init, gate order (i, f, g, o)."""
    k = 1.0 / np.sqrt(hidden_size)
    keys = jax.random.split(key, 6)
    weight_ih = jax.random.uniform(keys[0], (4 * hidden_size, input_size), jnp.float32, -k, k)
    weight_hh = jax.random.uniform(keys[1], (4 * hidden_size, hidden_size), jnp.float32, -k, k)
    bias_ih = jax.random.uniform(keys[2], (4 * hidden_size,), jnp.float32, -k, k)
    bias_hh = jax.random.uniform(keys[3], (4 * hidden_size,), jnp.float32, -k, k)
    fc_w = jax.random.uniform(keys[4], (output_size, hidden_size), jnp.float32, -k, k)
    fc_b = jax.random.uniform(keys[5], (output_size,), jnp.float32, -k, k)
    raw = (weight_ih, weight_hh, bias_ih, bias_hh, fc_w, fc_b)
    packed = pack_params(raw, hidden_size, HP)
    return raw, packed


if __name__ == "__main__":
    key = jax.random.PRNGKey(0)
    k_param, k_x = jax.random.split(key)

    B, T = 2, 8
    raw, packed = init_params(k_param, INPUT_SIZE, HIDDEN_SIZE, OUTPUT_SIZE)
    x = jax.random.normal(k_x, (B, T, INPUT_SIZE), jnp.float32)

    out = jax.block_until_ready(lstm_model_forward(x, packed))
    ref = jax.block_until_ready(lstm_model_ref(x, raw))

    assert out.shape == (B, T, OUTPUT_SIZE), out.shape
    np.testing.assert_allclose(np.asarray(out), np.asarray(ref), rtol=1e-5, atol=1e-5)
    print("KERNEL_OK")
</pallas_src>

<mosaic_0001>
module attributes {stable_mosaic.version = 11 : i64} {
  func.func @lstm_fc_kernel(%arg0: i32, %arg1: memref<8x2x1xf32, #tpu.memory_space<vmem>>, %arg2: memref<1x512xf32, #tpu.memory_space<vmem>>, %arg3: memref<128x512xf32, #tpu.memory_space<vmem>>, %arg4: memref<1x512xf32, #tpu.memory_space<vmem>>, %arg5: memref<1x128xf32, #tpu.memory_space<vmem>>, %arg6: memref<1x1xf32, #tpu.memory_space<vmem>>, %arg7: memref<8x2xf32, #tpu.memory_space<vmem>>, %arg8: memref<8x2x128xf32, #tpu.memory_space<vmem>>) attributes {dimension_semantics = [#tpu.dimension_semantics<parallel>], iteration_bounds = array<i64: 1>, scalar_prefetch = 0 : i64, scratch_operands = 1 : i64, tpu.core_type = #tpu.core_type<tc>, window_params = [{transform_indices = @transform_0, window_bounds = array<i64: 8, 2, 1>}, {pipeline_mode = #tpu.pipeline_mode<synchronous>, transform_indices = @transform_1, window_bounds = array<i64: 1, 512>}, {pipeline_mode = #tpu.pipeline_mode<synchronous>, transform_indices = @transform_2, window_bounds = array<i64: 128, 512>}, {pipeline_mode = #tpu.pipeline_mode<synchronous>, transform_indices = @transform_3, window_bounds = array<i64: 1, 512>}, {pipeline_mode = #tpu.pipeline_mode<synchronous>, transform_indices = @transform_4, window_bounds = array<i64: 1, 128>}, {pipeline_mode = #tpu.pipeline_mode<synchronous>, transform_indices = @transform_5, window_bounds = array<i64: 1, 1>}, {transform_indices = @transform_6, window_bounds = array<i64: 8, 2>}]} {
    %c0 = arith.constant 0 : index
    %c0_0 = arith.constant 0 : index
    %0 = vector.load %arg3[%c0, %c0_0] : memref<128x512xf32, #tpu.memory_space<vmem>>, vector<128x512xf32>
    %c0_1 = arith.constant 0 : index
    %c0_2 = arith.constant 0 : index
    %1 = vector.load %arg2[%c0_1, %c0_2] : memref<1x512xf32, #tpu.memory_space<vmem>>, vector<1x512xf32>
    %c0_3 = arith.constant 0 : index
    %c0_4 = arith.constant 0 : index
    %2 = vector.load %arg4[%c0_3, %c0_4] : memref<1x512xf32, #tpu.memory_space<vmem>>, vector<1x512xf32>
    %cst = arith.constant 0.000000e+00 : f32
    %3 = vector.broadcast %cst : f32 to vector<2x128xf32>
    %cst_5 = arith.constant 0.000000e+00 : f32
    %4 = vector.broadcast %cst_5 : f32 to vector<2x128xf32>
    %c0_i32 = arith.constant 0 : i32
    %5 = arith.index_cast %c0_i32 : i32 to index
    %c0_6 = arith.constant 0 : index
    %c0_7 = arith.constant 0 : index
    %6 = vector.load %arg1[%5, %c0_6, %c0_7] : memref<8x2x1xf32, #tpu.memory_space<vmem>>, vector<1x2x1xf32>
    %7 = vector.shape_cast %6 : vector<1x2x1xf32> to vector<2x1xf32>
    %8 = vector.broadcast %7 : vector<2x1xf32> to vector<2x512xf32>
    %9 = vector.broadcast %1 : vector<1x512xf32> to vector<2x512xf32>
    %10 = arith.mulf %8, %9 : vector<2x512xf32>
    %11 = vector.broadcast %2 : vector<1x512xf32> to vector<2x512xf32>
    %12 = arith.addf %11, %10 : vector<2x512xf32>
    %cst_8 = arith.constant dense<0.000000e+00> : vector<2x512xf32>
    %13 = tpu.matmul %3, %0, %cst_8 {dimension_numbers = #tpu.dot_dimension_numbers<[1], [0], [0], [1], [0, 0, 1, 1], [], []>} : vector<2x128xf32>, vector<128x512xf32>, vector<2x512xf32> -> vector<2x512xf32>
    %14 = arith.addf %13, %12 : vector<2x512xf32>
    %15 = vector.extract_strided_slice %14 {offsets = [0, 0], sizes = [2, 128], strides = [1, 1]} : vector<2x512xf32> to vector<2x128xf32>
    %cst_9 = arith.constant 5.000000e-01 : f32
    %16 = vector.broadcast %cst_9 : f32 to vector<2x128xf32>
    %17 = arith.mulf %16, %15 : vector<2x128xf32>
    %18 = math.tanh %17 : vector<2x128xf32>
    %cst_10 = arith.constant 5.000000e-01 : f32
    %19 = vector.broadcast %cst_10 : f32 to vector<2x128xf32>
    %20 = arith.mulf %19, %18 : vector<2x128xf32>
    %cst_11 = arith.constant 5.000000e-01 : f32
    %21 = vector.broadcast %cst_11 : f32 to vector<2x128xf32>
    %22 = arith.addf %20, %21 : vector<2x128xf32>
    %23 = vector.extract_strided_slice %14 {offsets = [0, 128], sizes = [2, 128], strides = [1, 1]} : vector<2x512xf32> to vector<2x128xf32>
    %cst_12 = arith.constant 5.000000e-01 : f32
    %24 = vector.broadcast %cst_12 : f32 to vector<2x128xf32>
    %25 = arith.mulf %24, %23 : vector<2x128xf32>
    %26 = math.tanh %25 : vector<2x128xf32>
    %cst_13 = arith.constant 5.000000e-01 : f32
    %27 = vector.broadcast %cst_13 : f32 to vector<2x128xf32>
    %28 = arith.mulf %27, %26 : vector<2x128xf32>
    %cst_14 = arith.constant 5.000000e-01 : f32
    %29 = vector.broadcast %cst_14 : f32 to vector<2x128xf32>
    %30 = arith.addf %28, %29 : vector<2x128xf32>
    %31 = vector.extract_strided_slice %14 {offsets = [0, 256], sizes = [2, 128], strides = [1, 1]} : vector<2x512xf32> to vector<2x128xf32>
    %32 = math.tanh %31 : vector<2x128xf32>
    %33 = vector.extract_strided_slice %14 {offsets = [0, 384], sizes = [2, 128], strides = [1, 1]} : vector<2x512xf32> to vector<2x128xf32>
    %cst_15 = arith.constant 5.000000e-01 : f32
    %34 = vector.broadcast %cst_15 : f32 to vector<2x128xf32>
    %35 = arith.mulf %34, %33 : vector<2x128xf32>
    %36 = math.tanh %35 : vector<2x128xf32>
    %cst_16 = arith.constant 5.000000e-01 : f32
    %37 = vector.broadcast %cst_16 : f32 to vector<2x128xf32>
    %38 = arith.mulf %37, %36 : vector<2x128xf32>
    %cst_17 = arith.constant 5.000000e-01 : f32
    %39 = vector.broadcast %cst_17 : f32 to vector<2x128xf32>
    %40 = arith.addf %38, %39 : vector<2x128xf32>
    %41 = arith.mulf %30, %4 : vector<2x128xf32>
    %42 = arith.mulf %22, %32 : vector<2x128xf32>
    %43 = arith.addf %41, %42 : vector<2x128xf32>
    %44 = math.tanh %43 : vector<2x128xf32>
    %45 = arith.mulf %40, %44 : vector<2x128xf32>
    %46 = arith.index_cast %c0_i32 : i32 to index
    %c0_18 = arith.constant 0 : index
    %c0_19 = arith.constant 0 : index
    %47 = vector.load %arg8[%46, %c0_18, %c0_19] : memref<8x2x128xf32, #tpu.memory_space<vmem>>, vector<1x2x128xf32>
    %48 = vector.shape_cast %47 : vector<1x2x128xf32> to vector<2x128xf32>
    %49 = vector.shape_cast %45 : vector<2x128xf32> to vector<1x2x128xf32>
    tpu.vector_store %arg8[%46, %c0_18, %c0_19], %49 {strides = array<i32>} : memref<8x2x128xf32, #tpu.memory_space<vmem>>, vector<1x2x128xf32>,
    %c1_i32 = arith.constant 1 : i32
    %50 = arith.index_cast %c1_i32 : i32 to index
    %c0_20 = arith.constant 0 : index
    %c0_21 = arith.constant 0 : index
    %51 = vector.load %arg1[%50, %c0_20, %c0_21] : memref<8x2x1xf32, #tpu.memory_space<vmem>>, vector<1x2x1xf32>
    %52 = vector.shape_cast %51 : vector<1x2x1xf32> to vector<2x1xf32>
    %53 = vector.broadcast %52 : vector<2x1xf32> to vector<2x512xf32>
    %54 = vector.broadcast %1 : vector<1x512xf32> to vector<2x512xf32>
    %55 = arith.mulf %53, %54 : vector<2x512xf32>
    %56 = vector.broadcast %2 : vector<1x512xf32> to vector<2x512xf32>
    %57 = arith.addf %56, %55 : vector<2x512xf32>
    %cst_22 = arith.constant dense<0.000000e+00> : vector<2x512xf32>
    %58 = tpu.matmul %45, %0, %cst_22 {dimension_numbers = #tpu.dot_dimension_numbers<[1], [0], [0], [1], [0, 0, 1, 1], [], []>} : vector<2x128xf32>, vector<128x512xf32>, vector<2x512xf32> -> vector<2x512xf32>
    %59 = arith.addf %58, %57 : vector<2x512xf32>
    %60 = vector.extract_strided_slice %59 {offsets = [0, 0], sizes = [2, 128], strides = [1, 1]} : vector<2x512xf32> to vector<2x128xf32>
    %cst_23 = arith.constant 5.000000e-01 : f32
    %61 = vector.broadcast %cst_23 : f32 to vector<2x128xf32>
    %62 = arith.mulf %61, %60 : vector<2x128xf32>
    %63 = math.tanh %62 : vector<2x128xf32>
    %cst_24 = arith.constant 5.000000e-01 : f32
    %64 = vector.broadcast %cst_24 : f32 to vector<2x128xf32>
    %65 = arith.mulf %64, %63 : vector<2x128xf32>
    %cst_25 = arith.constant 5.000000e-01 : f32
    %66 = vector.broadcast %cst_25 : f32 to vector<2x128xf32>
    %67 = arith.addf %65, %66 : vector<2x128xf32>
    %68 = vector.extract_strided_slice %59 {offsets = [0, 128], sizes = [2, 128], strides = [1, 1]} : vector<2x512xf32> to vector<2x128xf32>
    %cst_26 = arith.constant 5.000000e-01 : f32
    %69 = vector.broadcast %cst_26 : f32 to vector<2x128xf32>
    %70 = arith.mulf %69, %68 : vector<2x128xf32>
    %71 = math.tanh %70 : vector<2x128xf32>
    %cst_27 = arith.constant 5.000000e-01 : f32
    %72 = vector.broadcast %cst_27 : f32 to vector<2x128xf32>
    %73 = arith.mulf %72, %71 : vector<2x128xf32>
    %cst_28 = arith.constant 5.000000e-01 : f32
    %74 = vector.broadcast %cst_28 : f32 to vector<2x128xf32>
    %75 = arith.addf %73, %74 : vector<2x128xf32>
    %76 = vector.extract_strided_slice %59 {offsets = [0, 256], sizes = [2, 128], strides = [1, 1]} : vector<2x512xf32> to vector<2x128xf32>
    %77 = math.tanh %76 : vector<2x128xf32>
    %78 = vector.extract_strided_slice %59 {offsets = [0, 384], sizes = [2, 128], strides = [1, 1]} : vector<2x512xf32> to vector<2x128xf32>
    %cst_29 = arith.constant 5.000000e-01 : f32
    %79 = vector.broadcast %cst_29 : f32 to vector<2x128xf32>
    %80 = arith.mulf %79, %78 : vector<2x128xf32>
    %81 = math.tanh %80 : vector<2x128xf32>
    %cst_30 = arith.constant 5.000000e-01 : f32
    %82 = vector.broadcast %cst_30 : f32 to vector<2x128xf32>
    %83 = arith.mulf %82, %81 : vector<2x128xf32>
    %cst_31 = arith.constant 5.000000e-01 : f32
    %84 = vector.broadcast %cst_31 : f32 to vector<2x128xf32>
    %85 = arith.addf %83, %84 : vector<2x128xf32>
    %86 = arith.mulf %75, %43 : vector<2x128xf32>
    %87 = arith.mulf %67, %77 : vector<2x128xf32>
    %88 = arith.addf %86, %87 : vector<2x128xf32>
    %89 = math.tanh %88 : vector<2x128xf32>
    %90 = arith.mulf %85, %89 : vector<2x128xf32>
    %91 = arith.index_cast %c1_i32 : i32 to index
    %c0_32 = arith.constant 0 : index
    %c0_33 = arith.constant 0 : index
    %92 = vector.load %arg8[%91, %c0_32, %c0_33] : memref<8x2x128xf32, #tpu.memory_space<vmem>>, vector<1x2x128xf32>
    %93 = vector.shape_cast %92 : vector<1x2x128xf32> to vector<2x128xf32>
    %94 = vector.shape_cast %90 : vector<2x128xf32> to vector<1x2x128xf32>
    tpu.vector_store %arg8[%91, %c0_32, %c0_33], %94 {strides = array<i32>} : memref<8x2x128xf32, #tpu.memory_space<vmem>>, vector<1x2x128xf32>,
    %c2_i32 = arith.constant 2 : i32
    %95 = arith.index_cast %c2_i32 : i32 to index
    %c0_34 = arith.constant 0 : index
    %c0_35 = arith.constant 0 : index
    %96 = vector.load %arg1[%95, %c0_34, %c0_35] : memref<8x2x1xf32, #tpu.memory_space<vmem>>, vector<1x2x1xf32>
    %97 = vector.shape_cast %96 : vector<1x2x1xf32> to vector<2x1xf32>
    %98 = vector.broadcast %97 : vector<2x1xf32> to vector<2x512xf32>
    %99 = vector.broadcast %1 : vector<1x512xf32> to vector<2x512xf32>
    %100 = arith.mulf %98, %99 : vector<2x512xf32>
    %101 = vector.broadcast %2 : vector<1x512xf32> to vector<2x512xf32>
    %102 = arith.addf %101, %100 : vector<2x512xf32>
    %cst_36 = arith.constant dense<0.000000e+00> : vector<2x512xf32>
    %103 = tpu.matmul %90, %0, %cst_36 {dimension_numbers = #tpu.dot_dimension_numbers<[1], [0], [0], [1], [0, 0, 1, 1], [], []>} : vector<2x128xf32>, vector<128x512xf32>, vector<2x512xf32> -> vector<2x512xf32>
    %104 = arith.addf %103, %102 : vector<2x512xf32>
    %105 = vector.extract_strided_slice %104 {offsets = [0, 0], sizes = [2, 128], strides = [1, 1]} : vector<2x512xf32> to vector<2x128xf32>
    %cst_37 = arith.constant 5.000000e-01 : f32
    %106 = vector.broadcast %cst_37 : f32 to vector<2x128xf32>
    %107 = arith.mulf %106, %105 : vector<2x128xf32>
    %108 = math.tanh %107 : vector<2x128xf32>
    %cst_38 = arith.constant 5.000000e-01 : f32
    %109 = vector.broadcast %cst_38 : f32 to vector<2x128xf32>
    %110 = arith.mulf %109, %108 : vector<2x128xf32>
    %cst_39 = arith.constant 5.000000e-01 : f32
    %111 = vector.broadcast %cst_39 : f32 to vector<2x128xf32>
    %112 = arith.addf %110, %111 : vector<2x128xf32>
    %113 = vector.extract_strided_slice %104 {offsets = [0, 128], sizes = [2, 128], strides = [1, 1]} : vector<2x512xf32> to vector<2x128xf32>
    %cst_40 = arith.constant 5.000000e-01 : f32
    %114 = vector.broadcast %cst_40 : f32 to vector<2x128xf32>
    %115 = arith.mulf %114, %113 : vector<2x128xf32>
    %116 = math.tanh %115 : vector<2x128xf32>
    %cst_41 = arith.constant 5.000000e-01 : f32
    %117 = vector.broadcast %cst_41 : f32 to vector<2x128xf32>
    %118 = arith.mulf %117, %116 : vector<2x128xf32>
    %cst_42 = arith.constant 5.000000e-01 : f32
    %119 = vector.broadcast %cst_42 : f32 to vector<2x128xf32>
    %120 = arith.addf %118, %119 : vector<2x128xf32>
    %121 = vector.extract_strided_slice %104 {offsets = [0, 256], sizes = [2, 128], strides = [1, 1]} : vector<2x512xf32> to vector<2x128xf32>
    %122 = math.tanh %121 : vector<2x128xf32>
    %123 = vector.extract_strided_slice %104 {offsets = [0, 384], sizes = [2, 128], strides = [1, 1]} : vector<2x512xf32> to vector<2x128xf32>
    %cst_43 = arith.constant 5.000000e-01 : f32
    %124 = vector.broadcast %cst_43 : f32 to vector<2x128xf32>
    %125 = arith.mulf %124, %123 : vector<2x128xf32>
    %126 = math.tanh %125 : vector<2x128xf32>
    %cst_44 = arith.constant 5.000000e-01 : f32
    %127 = vector.broadcast %cst_44 : f32 to vector<2x128xf32>
    %128 = arith.mulf %127, %126 : vector<2x128xf32>
    %cst_45 = arith.constant 5.000000e-01 : f32
    %129 = vector.broadcast %cst_45 : f32 to vector<2x128xf32>
    %130 = arith.addf %128, %129 : vector<2x128xf32>
    %131 = arith.mulf %120, %88 : vector<2x128xf32>
    %132 = arith.mulf %112, %122 : vector<2x128xf32>
    %133 = arith.addf %131, %132 : vector<2x128xf32>
    %134 = math.tanh %133 : vector<2x128xf32>
    %135 = arith.mulf %130, %134 : vector<2x128xf32>
    %136 = arith.index_cast %c2_i32 : i32 to index
    %c0_46 = arith.constant 0 : index
    %c0_47 = arith.constant 0 : index
    %137 = vector.load %arg8[%136, %c0_46, %c0_47] : memref<8x2x128xf32, #tpu.memory_space<vmem>>, vector<1x2x128xf32>
    %138 = vector.shape_cast %137 : vector<1x2x128xf32> to vector<2x128xf32>
    %139 = vector.shape_cast %135 : vector<2x128xf32> to vector<1x2x128xf32>
    tpu.vector_store %arg8[%136, %c0_46, %c0_47], %139 {strides = array<i32>} : memref<8x2x128xf32, #tpu.memory_space<vmem>>, vector<1x2x128xf32>,
    %c3_i32 = arith.constant 3 : i32
    %140 = arith.index_cast %c3_i32 : i32 to index
    %c0_48 = arith.constant 0 : index
    %c0_49 = arith.constant 0 : index
    %141 = vector.load %arg1[%140, %c0_48, %c0_49] : memref<8x2x1xf32, #tpu.memory_space<vmem>>, vector<1x2x1xf32>
    %142 = vector.shape_cast %141 : vector<1x2x1xf32> to vector<2x1xf32>
    %143 = vector.broadcast %142 : vector<2x1xf32> to vector<2x512xf32>
    %144 = vector.broadcast %1 : vector<1x512xf32> to vector<2x512xf32>
    %145 = arith.mulf %143, %144 : vector<2x512xf32>
    %146 = vector.broadcast %2 : vector<1x512xf32> to vector<2x512xf32>
    %147 = arith.addf %146, %145 : vector<2x512xf32>
    %cst_50 = arith.constant dense<0.000000e+00> : vector<2x512xf32>
    %148 = tpu.matmul %135, %0, %cst_50 {dimension_numbers = #tpu.dot_dimension_numbers<[1], [0], [0], [1], [0, 0, 1, 1], [], []>} : vector<2x128xf32>, vector<128x512xf32>, vector<2x512xf32> -> vector<2x512xf32>
    %149 = arith.addf %148, %147 : vector<2x512xf32>
    %150 = vector.extract_strided_slice %149 {offsets = [0, 0], sizes = [2, 128], strides = [1, 1]} : vector<2x512xf32> to vector<2x128xf32>
    %cst_51 = arith.constant 5.000000e-01 : f32
    %151 = vector.broadcast %cst_51 : f32 to vector<2x128xf32>
    %152 = arith.mulf %151, %150 : vector<2x128xf32>
    %153 = math.tanh %152 : vector<2x128xf32>
    %cst_52 = arith.constant 5.000000e-01 : f32
    %154 = vector.broadcast %cst_52 : f32 to vector<2x128xf32>
    %155 = arith.mulf %154, %153 : vector<2x128xf32>
    %cst_53 = arith.constant 5.000000e-01 : f32
    %156 = vector.broadcast %cst_53 : f32 to vector<2x128xf32>
    %157 = arith.addf %155, %156 : vector<2x128xf32>
    %158 = vector.extract_strided_slice %149 {offsets = [0, 128], sizes = [2, 128], strides = [1, 1]} : vector<2x512xf32> to vector<2x128xf32>
    %cst_54 = arith.constant 5.000000e-01 : f32
    %159 = vector.broadcast %cst_54 : f32 to vector<2x128xf32>
    %160 = arith.mulf %159, %158 : vector<2x128xf32>
    %161 = math.tanh %160 : vector<2x128xf32>
    %cst_55 = arith.constant 5.000000e-01 : f32
    %162 = vector.broadcast %cst_55 : f32 to vector<2x128xf32>
    %163 = arith.mulf %162, %161 : vector<2x128xf32>
    %cst_56 = arith.constant 5.000000e-01 : f32
    %164 = vector.broadcast %cst_56 : f32 to vector<2x128xf32>
    %165 = arith.addf %163, %164 : vector<2x128xf32>
    %166 = vector.extract_strided_slice %149 {offsets = [0, 256], sizes = [2, 128], strides = [1, 1]} : vector<2x512xf32> to vector<2x128xf32>
    %167 = math.tanh %166 : vector<2x128xf32>
    %168 = vector.extract_strided_slice %149 {offsets = [0, 384], sizes = [2, 128], strides = [1, 1]} : vector<2x512xf32> to vector<2x128xf32>
    %cst_57 = arith.constant 5.000000e-01 : f32
    %169 = vector.broadcast %cst_57 : f32 to vector<2x128xf32>
    %170 = arith.mulf %169, %168 : vector<2x128xf32>
    %171 = math.tanh %170 : vector<2x128xf32>
    %cst_58 = arith.constant 5.000000e-01 : f32
    %172 = vector.broadcast %cst_58 : f32 to vector<2x128xf32>
    %173 = arith.mulf %172, %171 : vector<2x128xf32>
    %cst_59 = arith.constant 5.000000e-01 : f32
    %174 = vector.broadcast %cst_59 : f32 to vector<2x128xf32>
    %175 = arith.addf %173, %174 : vector<2x128xf32>
    %176 = arith.mulf %165, %133 : vector<2x128xf32>
    %177 = arith.mulf %157, %167 : vector<2x128xf32>
    %178 = arith.addf %176, %177 : vector<2x128xf32>
    %179 = math.tanh %178 : vector<2x128xf32>
    %180 = arith.mulf %175, %179 : vector<2x128xf32>
    %181 = arith.index_cast %c3_i32 : i32 to index
    %c0_60 = arith.constant 0 : index
    %c0_61 = arith.constant 0 : index
    %182 = vector.load %arg8[%181, %c0_60, %c0_61] : memref<8x2x128xf32, #tpu.memory_space<vmem>>, vector<1x2x128xf32>
    %183 = vector.shape_cast %182 : vector<1x2x128xf32> to vector<2x128xf32>
    %184 = vector.shape_cast %180 : vector<2x128xf32> to vector<1x2x128xf32>
    tpu.vector_store %arg8[%181, %c0_60, %c0_61], %184 {strides = array<i32>} : memref<8x2x128xf32, #tpu.memory_space<vmem>>, vector<1x2x128xf32>,
    %c4_i32 = arith.constant 4 : i32
    %185 = arith.index_cast %c4_i32 : i32 to index
    %c0_62 = arith.constant 0 : index
    %c0_63 = arith.constant 0 : index
    %186 = vector.load %arg1[%185, %c0_62, %c0_63] : memref<8x2x1xf32, #tpu.memory_space<vmem>>, vector<1x2x1xf32>
    %187 = vector.shape_cast %186 : vector<1x2x1xf32> to vector<2x1xf32>
    %188 = vector.broadcast %187 : vector<2x1xf32> to vector<2x512xf32>
    %189 = vector.broadcast %1 : vector<1x512xf32> to vector<2x512xf32>
    %190 = arith.mulf %188, %189 : vector<2x512xf32>
    %191 = vector.broadcast %2 : vector<1x512xf32> to vector<2x512xf32>
    %192 = arith.addf %191, %190 : vector<2x512xf32>
    %cst_64 = arith.constant dense<0.000000e+00> : vector<2x512xf32>
    %193 = tpu.matmul %180, %0, %cst_64 {dimension_numbers = #tpu.dot_dimension_numbers<[1], [0], [0], [1], [0, 0, 1, 1], [], []>} : vector<2x128xf32>, vector<128x512xf32>, vector<2x512xf32> -> vector<2x512xf32>
    %194 = arith.addf %193, %192 : vector<2x512xf32>
    %195 = vector.extract_strided_slice %194 {offsets = [0, 0], sizes = [2, 128], strides = [1, 1]} : vector<2x512xf32> to vector<2x128xf32>
    %cst_65 = arith.constant 5.000000e-01 : f32
    %196 = vector.broadcast %cst_65 : f32 to vector<2x128xf32>
    %197 = arith.mulf %196, %195 : vector<2x128xf32>
    %198 = math.tanh %197 : vector<2x128xf32>
    %cst_66 = arith.constant 5.000000e-01 : f32
    %199 = vector.broadcast %cst_66 : f32 to vector<2x128xf32>
    %200 = arith.mulf %199, %198 : vector<2x128xf32>
    %cst_67 = arith.constant 5.000000e-01 : f32
    %201 = vector.broadcast %cst_67 : f32 to vector<2x128xf32>
    %202 = arith.addf %200, %201 : vector<2x128xf32>
    %203 = vector.extract_strided_slice %194 {offsets = [0, 128], sizes = [2, 128], strides = [1, 1]} : vector<2x512xf32> to vector<2x128xf32>
    %cst_68 = arith.constant 5.000000e-01 : f32
    %204 = vector.broadcast %cst_68 : f32 to vector<2x128xf32>
    %205 = arith.mulf %204, %203 : vector<2x128xf32>
    %206 = math.tanh %205 : vector<2x128xf32>
    %cst_69 = arith.constant 5.000000e-01 : f32
    %207 = vector.broadcast %cst_69 : f32 to vector<2x128xf32>
    %208 = arith.mulf %207, %206 : vector<2x128xf32>
    %cst_70 = arith.constant 5.000000e-01 : f32
    %209 = vector.broadcast %cst_70 : f32 to vector<2x128xf32>
    %210 = arith.addf %208, %209 : vector<2x128xf32>
    %211 = vector.extract_strided_slice %194 {offsets = [0, 256], sizes = [2, 128], strides = [1, 1]} : vector<2x512xf32> to vector<2x128xf32>
    %212 = math.tanh %211 : vector<2x128xf32>
    %213 = vector.extract_strided_slice %194 {offsets = [0, 384], sizes = [2, 128], strides = [1, 1]} : vector<2x512xf32> to vector<2x128xf32>
    %cst_71 = arith.constant 5.000000e-01 : f32
    %214 = vector.broadcast %cst_71 : f32 to vector<2x128xf32>
    %215 = arith.mulf %214, %213 : vector<2x128xf32>
    %216 = math.tanh %215 : vector<2x128xf32>
    %cst_72 = arith.constant 5.000000e-01 : f32
    %217 = vector.broadcast %cst_72 : f32 to vector<2x128xf32>
    %218 = arith.mulf %217, %216 : vector<2x128xf32>
    %cst_73 = arith.constant 5.000000e-01 : f32
    %219 = vector.broadcast %cst_73 : f32 to vector<2x128xf32>
    %220 = arith.addf %218, %219 : vector<2x128xf32>
    %221 = arith.mulf %210, %178 : vector<2x128xf32>
    %222 = arith.mulf %202, %212 : vector<2x128xf32>
    %223 = arith.addf %221, %222 : vector<2x128xf32>
    %224 = math.tanh %223 : vector<2x128xf32>
    %225 = arith.mulf %220, %224 : vector<2x128xf32>
    %226 = arith.index_cast %c4_i32 : i32 to index
    %c0_74 = arith.constant 0 : index
    %c0_75 = arith.constant 0 : index
    %227 = vector.load %arg8[%226, %c0_74, %c0_75] : memref<8x2x128xf32, #tpu.memory_space<vmem>>, vector<1x2x128xf32>
    %228 = vector.shape_cast %227 : vector<1x2x128xf32> to vector<2x128xf32>
    %229 = vector.shape_cast %225 : vector<2x128xf32> to vector<1x2x128xf32>
    tpu.vector_store %arg8[%226, %c0_74, %c0_75], %229 {strides = array<i32>} : memref<8x2x128xf32, #tpu.memory_space<vmem>>, vector<1x2x128xf32>,
    %c5_i32 = arith.constant 5 : i32
    %230 = arith.index_cast %c5_i32 : i32 to index
    %c0_76 = arith.constant 0 : index
    %c0_77 = arith.constant 0 : index
    %231 = vector.load %arg1[%230, %c0_76, %c0_77] : memref<8x2x1xf32, #tpu.memory_space<vmem>>, vector<1x2x1xf32>
    %232 = vector.shape_cast %231 : vector<1x2x1xf32> to vector<2x1xf32>
    %233 = vector.broadcast %232 : vector<2x1xf32> to vector<2x512xf32>
    %234 = vector.broadcast %1 : vector<1x512xf32> to vector<2x512xf32>
    %235 = arith.mulf %233, %234 : vector<2x512xf32>
    %236 = vector.broadcast %2 : vector<1x512xf32> to vector<2x512xf32>
    %237 = arith.addf %236, %235 : vector<2x512xf32>
    %cst_78 = arith.constant dense<0.000000e+00> : vector<2x512xf32>
    %238 = tpu.matmul %225, %0, %cst_78 {dimension_numbers = #tpu.dot_dimension_numbers<[1], [0], [0], [1], [0, 0, 1, 1], [], []>} : vector<2x128xf32>, vector<128x512xf32>, vector<2x512xf32> -> vector<2x512xf32>
    %239 = arith.addf %238, %237 : vector<2x512xf32>
    %240 = vector.extract_strided_slice %239 {offsets = [0, 0], sizes = [2, 128], strides = [1, 1]} : vector<2x512xf32> to vector<2x128xf32>
    %cst_79 = arith.constant 5.000000e-01 : f32
    %241 = vector.broadcast %cst_79 : f32 to vector<2x128xf32>
    %242 = arith.mulf %241, %240 : vector<2x128xf32>
    %243 = math.tanh %242 : vector<2x128xf32>
    %cst_80 = arith.constant 5.000000e-01 : f32
    %244 = vector.broadcast %cst_80 : f32 to vector<2x128xf32>
    %245 = arith.mulf %244, %243 : vector<2x128xf32>
    %cst_81 = arith.constant 5.000000e-01 : f32
    %246 = vector.broadcast %cst_81 : f32 to vector<2x128xf32>
    %247 = arith.addf %245, %246 : vector<2x128xf32>
    %248 = vector.extract_strided_slice %239 {offsets = [0, 128], sizes = [2, 128], strides = [1, 1]} : vector<2x512xf32> to vector<2x128xf32>
    %cst_82 = arith.constant 5.000000e-01 : f32
    %249 = vector.broadcast %cst_82 : f32 to vector<2x128xf32>
    %250 = arith.mulf %249, %248 : vector<2x128xf32>
    %251 = math.tanh %250 : vector<2x128xf32>
    %cst_83 = arith.constant 5.000000e-01 : f32
    %252 = vector.broadcast %cst_83 : f32 to vector<2x128xf32>
    %253 = arith.mulf %252, %251 : vector<2x128xf32>
    %cst_84 = arith.constant 5.000000e-01 : f32
    %254 = vector.broadcast %cst_84 : f32 to vector<2x128xf32>
    %255 = arith.addf %253, %254 : vector<2x128xf32>
    %256 = vector.extract_strided_slice %239 {offsets = [0, 256], sizes = [2, 128], strides = [1, 1]} : vector<2x512xf32> to vector<2x128xf32>
    %257 = math.tanh %256 : vector<2x128xf32>
    %258 = vector.extract_strided_slice %239 {offsets = [0, 384], sizes = [2, 128], strides = [1, 1]} : vector<2x512xf32> to vector<2x128xf32>
    %cst_85 = arith.constant 5.000000e-01 : f32
    %259 = vector.broadcast %cst_85 : f32 to vector<2x128xf32>
    %260 = arith.mulf %259, %258 : vector<2x128xf32>
    %261 = math.tanh %260 : vector<2x128xf32>
    %cst_86 = arith.constant 5.000000e-01 : f32
    %262 = vector.broadcast %cst_86 : f32 to vector<2x128xf32>
    %263 = arith.mulf %262, %261 : vector<2x128xf32>
    %cst_87 = arith.constant 5.000000e-01 : f32
    %264 = vector.broadcast %cst_87 : f32 to vector<2x128xf32>
    %265 = arith.addf %263, %264 : vector<2x128xf32>
    %266 = arith.mulf %255, %223 : vector<2x128xf32>
    %267 = arith.mulf %247, %257 : vector<2x128xf32>
    %268 = arith.addf %266, %267 : vector<2x128xf32>
    %269 = math.tanh %268 : vector<2x128xf32>
    %270 = arith.mulf %265, %269 : vector<2x128xf32>
    %271 = arith.index_cast %c5_i32 : i32 to index
    %c0_88 = arith.constant 0 : index
    %c0_89 = arith.constant 0 : index
    %272 = vector.load %arg8[%271, %c0_88, %c0_89] : memref<8x2x128xf32, #tpu.memory_space<vmem>>, vector<1x2x128xf32>
    %273 = vector.shape_cast %272 : vector<1x2x128xf32> to vector<2x128xf32>
    %274 = vector.shape_cast %270 : vector<2x128xf32> to vector<1x2x128xf32>
    tpu.vector_store %arg8[%271, %c0_88, %c0_89], %274 {strides = array<i32>} : memref<8x2x128xf32, #tpu.memory_space<vmem>>, vector<1x2x128xf32>,
    %c6_i32 = arith.constant 6 : i32
    %275 = arith.index_cast %c6_i32 : i32 to index
    %c0_90 = arith.constant 0 : index
    %c0_91 = arith.constant 0 : index
    %276 = vector.load %arg1[%275, %c0_90, %c0_91] : memref<8x2x1xf32, #tpu.memory_space<vmem>>, vector<1x2x1xf32>
    %277 = vector.shape_cast %276 : vector<1x2x1xf32> to vector<2x1xf32>
    %278 = vector.broadcast %277 : vector<2x1xf32> to vector<2x512xf32>
    %279 = vector.broadcast %1 : vector<1x512xf32> to vector<2x512xf32>
    %280 = arith.mulf %278, %279 : vector<2x512xf32>
    %281 = vector.broadcast %2 : vector<1x512xf32> to vector<2x512xf32>
    %282 = arith.addf %281, %280 : vector<2x512xf32>
    %cst_92 = arith.constant dense<0.000000e+00> : vector<2x512xf32>
    %283 = tpu.matmul %270, %0, %cst_92 {dimension_numbers = #tpu.dot_dimension_numbers<[1], [0], [0], [1], [0, 0, 1, 1], [], []>} : vector<2x128xf32>, vector<128x512xf32>, vector<2x512xf32> -> vector<2x512xf32>
    %284 = arith.addf %283, %282 : vector<2x512xf32>
    %285 = vector.extract_strided_slice %284 {offsets = [0, 0], sizes = [2, 128], strides = [1, 1]} : vector<2x512xf32> to vector<2x128xf32>
    %cst_93 = arith.constant 5.000000e-01 : f32
    %286 = vector.broadcast %cst_93 : f32 to vector<2x128xf32>
    %287 = arith.mulf %286, %285 : vector<2x128xf32>
    %288 = math.tanh %287 : vector<2x128xf32>
    %cst_94 = arith.constant 5.000000e-01 : f32
    %289 = vector.broadcast %cst_94 : f32 to vector<2x128xf32>
    %290 = arith.mulf %289, %288 : vector<2x128xf32>
    %cst_95 = arith.constant 5.000000e-01 : f32
    %291 = vector.broadcast %cst_95 : f32 to vector<2x128xf32>
    %292 = arith.addf %290, %291 : vector<2x128xf32>
    %293 = vector.extract_strided_slice %284 {offsets = [0, 128], sizes = [2, 128], strides = [1, 1]} : vector<2x512xf32> to vector<2x128xf32>
    %cst_96 = arith.constant 5.000000e-01 : f32
    %294 = vector.broadcast %cst_96 : f32 to vector<2x128xf32>
    %295 = arith.mulf %294, %293 : vector<2x128xf32>
    %296 = math.tanh %295 : vector<2x128xf32>
    %cst_97 = arith.constant 5.000000e-01 : f32
    %297 = vector.broadcast %cst_97 : f32 to vector<2x128xf32>
    %298 = arith.mulf %297, %296 : vector<2x128xf32>
    %cst_98 = arith.constant 5.000000e-01 : f32
    %299 = vector.broadcast %cst_98 : f32 to vector<2x128xf32>
    %300 = arith.addf %298, %299 : vector<2x128xf32>
    %301 = vector.extract_strided_slice %284 {offsets = [0, 256], sizes = [2, 128], strides = [1, 1]} : vector<2x512xf32> to vector<2x128xf32>
    %302 = math.tanh %301 : vector<2x128xf32>
    %303 = vector.extract_strided_slice %284 {offsets = [0, 384], sizes = [2, 128], strides = [1, 1]} : vector<2x512xf32> to vector<2x128xf32>
    %cst_99 = arith.constant 5.000000e-01 : f32
    %304 = vector.broadcast %cst_99 : f32 to vector<2x128xf32>
    %305 = arith.mulf %304, %303 : vector<2x128xf32>
    %306 = math.tanh %305 : vector<2x128xf32>
    %cst_100 = arith.constant 5.000000e-01 : f32
    %307 = vector.broadcast %cst_100 : f32 to vector<2x128xf32>
    %308 = arith.mulf %307, %306 : vector<2x128xf32>
    %cst_101 = arith.constant 5.000000e-01 : f32
    %309 = vector.broadcast %cst_101 : f32 to vector<2x128xf32>
    %310 = arith.addf %308, %309 : vector<2x128xf32>
    %311 = arith.mulf %300, %268 : vector<2x128xf32>
    %312 = arith.mulf %292, %302 : vector<2x128xf32>
    %313 = arith.addf %311, %312 : vector<2x128xf32>
    %314 = math.tanh %313 : vector<2x128xf32>
    %315 = arith.mulf %310, %314 : vector<2x128xf32>
    %316 = arith.index_cast %c6_i32 : i32 to index
    %c0_102 = arith.constant 0 : index
    %c0_103 = arith.constant 0 : index
    %317 = vector.load %arg8[%316, %c0_102, %c0_103] : memref<8x2x128xf32, #tpu.memory_space<vmem>>, vector<1x2x128xf32>
    %318 = vector.shape_cast %317 : vector<1x2x128xf32> to vector<2x128xf32>
    %319 = vector.shape_cast %315 : vector<2x128xf32> to vector<1x2x128xf32>
    tpu.vector_store %arg8[%316, %c0_102, %c0_103], %319 {strides = array<i32>} : memref<8x2x128xf32, #tpu.memory_space<vmem>>, vector<1x2x128xf32>,
    %c7_i32 = arith.constant 7 : i32
    %320 = arith.index_cast %c7_i32 : i32 to index
    %c0_104 = arith.constant 0 : index
    %c0_105 = arith.constant 0 : index
    %321 = vector.load %arg1[%320, %c0_104, %c0_105] : memref<8x2x1xf32, #tpu.memory_space<vmem>>, vector<1x2x1xf32>
    %322 = vector.shape_cast %321 : vector<1x2x1xf32> to vector<2x1xf32>
    %323 = vector.broadcast %322 : vector<2x1xf32> to vector<2x512xf32>
    %324 = vector.broadcast %1 : vector<1x512xf32> to vector<2x512xf32>
    %325 = arith.mulf %323, %324 : vector<2x512xf32>
    %326 = vector.broadcast %2 : vector<1x512xf32> to vector<2x512xf32>
    %327 = arith.addf %326, %325 : vector<2x512xf32>
    %cst_106 = arith.constant dense<0.000000e+00> : vector<2x512xf32>
    %328 = tpu.matmul %315, %0, %cst_106 {dimension_numbers = #tpu.dot_dimension_numbers<[1], [0], [0], [1], [0, 0, 1, 1], [], []>} : vector<2x128xf32>, vector<128x512xf32>, vector<2x512xf32> -> vector<2x512xf32>
    %329 = arith.addf %328, %327 : vector<2x512xf32>
    %330 = vector.extract_strided_slice %329 {offsets = [0, 0], sizes = [2, 128], strides = [1, 1]} : vector<2x512xf32> to vector<2x128xf32>
    %cst_107 = arith.constant 5.000000e-01 : f32
    %331 = vector.broadcast %cst_107 : f32 to vector<2x128xf32>
    %332 = arith.mulf %331, %330 : vector<2x128xf32>
    %333 = math.tanh %332 : vector<2x128xf32>
    %cst_108 = arith.constant 5.000000e-01 : f32
    %334 = vector.broadcast %cst_108 : f32 to vector<2x128xf32>
    %335 = arith.mulf %334, %333 : vector<2x128xf32>
    %cst_109 = arith.constant 5.000000e-01 : f32
    %336 = vector.broadcast %cst_109 : f32 to vector<2x128xf32>
    %337 = arith.addf %335, %336 : vector<2x128xf32>
    %338 = vector.extract_strided_slice %329 {offsets = [0, 128], sizes = [2, 128], strides = [1, 1]} : vector<2x512xf32> to vector<2x128xf32>
    %cst_110 = arith.constant 5.000000e-01 : f32
    %339 = vector.broadcast %cst_110 : f32 to vector<2x128xf32>
    %340 = arith.mulf %339, %338 : vector<2x128xf32>
    %341 = math.tanh %340 : vector<2x128xf32>
    %cst_111 = arith.constant 5.000000e-01 : f32
    %342 = vector.broadcast %cst_111 : f32 to vector<2x128xf32>
    %343 = arith.mulf %342, %341 : vector<2x128xf32>
    %cst_112 = arith.constant 5.000000e-01 : f32
    %344 = vector.broadcast %cst_112 : f32 to vector<2x128xf32>
    %345 = arith.addf %343, %344 : vector<2x128xf32>
    %346 = vector.extract_strided_slice %329 {offsets = [0, 256], sizes = [2, 128], strides = [1, 1]} : vector<2x512xf32> to vector<2x128xf32>
    %347 = math.tanh %346 : vector<2x128xf32>
    %348 = vector.extract_strided_slice %329 {offsets = [0, 384], sizes = [2, 128], strides = [1, 1]} : vector<2x512xf32> to vector<2x128xf32>
    %cst_113 = arith.constant 5.000000e-01 : f32
    %349 = vector.broadcast %cst_113 : f32 to vector<2x128xf32>
    %350 = arith.mulf %349, %348 : vector<2x128xf32>
    %351 = math.tanh %350 : vector<2x128xf32>
    %cst_114 = arith.constant 5.000000e-01 : f32
    %352 = vector.broadcast %cst_114 : f32 to vector<2x128xf32>
    %353 = arith.mulf %352, %351 : vector<2x128xf32>
    %cst_115 = arith.constant 5.000000e-01 : f32
    %354 = vector.broadcast %cst_115 : f32 to vector<2x128xf32>
    %355 = arith.addf %353, %354 : vector<2x128xf32>
    %356 = arith.mulf %345, %313 : vector<2x128xf32>
    %357 = arith.mulf %337, %347 : vector<2x128xf32>
    %358 = arith.addf %356, %357 : vector<2x128xf32>
    %359 = math.tanh %358 : vector<2x128xf32>
    %360 = arith.mulf %355, %359 : vector<2x128xf32>
    %361 = arith.index_cast %c7_i32 : i32 to index
    %c0_116 = arith.constant 0 : index
    %c0_117 = arith.constant 0 : index
    %362 = vector.load %arg8[%361, %c0_116, %c0_117] : memref<8x2x128xf32, #tpu.memory_space<vmem>>, vector<1x2x128xf32>
    %363 = vector.shape_cast %362 : vector<1x2x128xf32> to vector<2x128xf32>
    %364 = vector.shape_cast %360 : vector<2x128xf32> to vector<1x2x128xf32>
    tpu.vector_store %arg8[%361, %c0_116, %c0_117], %364 {strides = array<i32>} : memref<8x2x128xf32, #tpu.memory_space<vmem>>, vector<1x2x128xf32>,
    %c8_i32 = arith.constant 8 : i32
    %c0_118 = arith.constant 0 : index
    %c0_119 = arith.constant 0 : index
    %c0_120 = arith.constant 0 : index
    %365 = vector.load %arg8[%c0_118, %c0_119, %c0_120] : memref<8x2x128xf32, #tpu.memory_space<vmem>>, vector<8x2x128xf32>
    %c0_121 = arith.constant 0 : index
    %c0_122 = arith.constant 0 : index
    %366 = vector.load %arg5[%c0_121, %c0_122] : memref<1x128xf32, #tpu.memory_space<vmem>>, vector<1x128xf32>
    %367 = vector.shape_cast %366 : vector<1x128xf32> to vector<1x1x128xf32>
    %368 = vector.broadcast %367 : vector<1x1x128xf32> to vector<8x2x128xf32>
    %369 = arith.mulf %365, %368 : vector<8x2x128xf32>
    %cst_123 = arith.constant dense<0.000000e+00> : vector<8x2xf32>
    %370 = vector.multi_reduction <add>, %369, %cst_123 [2] : vector<8x2x128xf32> to vector<8x2xf32>
    %c0_124 = arith.constant 0 : index
    %c0_125 = arith.constant 0 : index
    %371 = vector.load %arg6[%c0_124, %c0_125] : memref<1x1xf32, #tpu.memory_space<vmem>>, vector<1x1xf32>
    %372 = vector.broadcast %371 : vector<1x1xf32> to vector<8x2xf32>
    %373 = arith.addf %370, %372 : vector<8x2xf32>
    %c0_126 = arith.constant 0 : index
    %c0_127 = arith.constant 0 : index
    %374 = vector.load %arg7[%c0_126, %c0_127] : memref<8x2xf32, #tpu.memory_space<vmem>>, vector<8x2xf32>
    tpu.vector_store %arg7[%c0_126, %c0_127], %373 {strides = array<i32>} : memref<8x2xf32, #tpu.memory_space<vmem>>, vector<8x2xf32>,
    return
  }
  func.func @transform_0(%arg0: i32) -> (i32, i32, i32) {
    %c0_i32 = arith.constant 0 : i32
    %c0_i32_0 = arith.constant 0 : i32
    %c0_i32_1 = arith.constant 0 : i32
    return %c0_i32, %arg0, %c0_i32_0 : i32, i32, i32
  }
  func.func @transform_1(%arg0: i32) -> (i32, i32) {
    %c0_i32 = arith.constant 0 : i32
    %c0_i32_0 = arith.constant 0 : i32
    %c0_i32_1 = arith.constant 0 : i32
    return %c0_i32, %c0_i32_0 : i32, i32
  }
  func.func @transform_2(%arg0: i32) -> (i32, i32) {
    %c0_i32 = arith.constant 0 : i32
    %c0_i32_0 = arith.constant 0 : i32
    %c0_i32_1 = arith.constant 0 : i32
    return %c0_i32, %c0_i32_0 : i32, i32
  }
  func.func @transform_3(%arg0: i32) -> (i32, i32) {
    %c0_i32 = arith.constant 0 : i32
    %c0_i32_0 = arith.constant 0 : i32
    %c0_i32_1 = arith.constant 0 : i32
    return %c0_i32, %c0_i32_0 : i32, i32
  }
  func.func @transform_4(%arg0: i32) -> (i32, i32) {
    %c0_i32 = arith.constant 0 : i32
    %c0_i32_0 = arith.constant 0 : i32
    %c0_i32_1 = arith.constant 0 : i32
    return %c0_i32, %c0_i32_0 : i32, i32
  }
  func.func @transform_5(%arg0: i32) -> (i32, i32) {
    %c0_i32 = arith.constant 0 : i32
    %c0_i32_0 = arith.constant 0 : i32
    %c0_i32_1 = arith.constant 0 : i32
    return %c0_i32, %c0_i32_0 : i32, i32
  }
  func.func @transform_6(%arg0: i32) -> (i32, i32) {
    %c0_i32 = arith.constant 0 : i32
    %c0_i32_0 = arith.constant 0 : i32
    return %c0_i32, %arg0 : i32, i32
  }
}

</mosaic_0001>

<llo_original>
// kernel: tpu_custom_call.1
$region0: #{tpu_custom_call.1}
  #allocation0 [shape = 'u32[]', space=smem, size = 0x4, offset = 0x4, fixed_abs, tag = 'smem constant byte address 0x4 - core index']
  #allocation1 [shape = 'u32[144,128]{1,0:T(1,128)}', space=vmem, size = 0x12000, scoped, tag = 'internal scratch']
  #allocation2 [shape = 'f32[8,2,128]{2,1,0:T(2,128)}', space=vmem, size = 0x2000, scoped, tag = 'scratch operand']
  #allocation3 [shape = 'f32[1,1]{1,0:T(1,128)S(1)}', space=vmem, size = 0x200, scoped, tag = 'scoped memory for tpu_custom_call.1']
  %s0 = inlined_call_operand.vmem [shape: f32[8,2,1], index: 0, kind: input, shape index: {}]
  %s1 = inlined_call_operand.vmem [shape: f32[1,512], index: 1, kind: input, shape index: {}]
  %s2 = inlined_call_operand.hbm [shape: f32[128,512], index: 2, kind: input, shape index: {}]
  %s3 = inlined_call_operand.vmem [shape: f32[1,512], index: 3, kind: input, shape index: {}]
  %s4 = inlined_call_operand.vmem [shape: f32[1,128], index: 4, kind: input, shape index: {}]
  %s5 = inlined_call_operand.<no memory space> [shape: f32[1,1], index: 5, kind: input, shape index: {}]
  %s6 = inlined_call_operand.vmem [shape: f32[8,2], index: 6, kind: output, shape index: {}]
  %s7 = sld [smem:[#allocation0]]
  $region38: #{tpu_custom_call.1} parent=0
    _
  %s9 = ssub.s32 1, %s7
  %s10 = scalar_select 0, %s9, %s7
  %v11 = vstv %s5
  %12 = vst [vmem:[#allocation3] sm:$0x1] %v11
  $region1: #{tpu_custom_call.1} parent=0
    #allocation4 [shape = 'u8[262144]{0}', space=vmem, size = 0x40000, scoped, tag = 'input window, operand 2, single buffered']
    #allocation5 [shape = 's32[1]{0}', space=sflag, size = 0x4, scoped, tag = 'scoped memory for tpu_custom_call.1']
    %13 = vsyncpa [#allocation5], 0
    // Predicated region
    $region2: #{tpu_custom_call.1} parent=1 // pred_check
      _
    $region3: #{tpu_custom_call.1} parent=1 // pred_check_branch
      %15 = sbr.rel (0) target = $region5
    $region4: #{tpu_custom_call.1} parent=1 // pred_region
      _
    $region5: #{tpu_custom_call.1} parent=1 // pred_fallthru
      _
    // Predicated region
    $region6: #{tpu_custom_call.1} parent=1 // pred_check
      _
    $region7: #{tpu_custom_call.1} parent=1 // pred_check_branch
      %17 = sbr.rel (0) target = $region9
    $region8: #{tpu_custom_call.1} parent=1 // pred_region
      _
    $region9: #{tpu_custom_call.1} parent=1 // pred_fallthru
      _
    // Predicated region
    $region10: #{tpu_custom_call.1} parent=1 // pred_check
      _
    $region11: #{tpu_custom_call.1} parent=1 // pred_check_branch
      %19 = sbr.rel (0) target = $region13
    $region12: #{tpu_custom_call.1} parent=1 // pred_region
      %s21 = ssub.s32 8192, 8192
      %22 = vsyncadd [#allocation5], %s21
      %s23 = sshll.u32 [#allocation4], 4
      %s24 = int_to_ptr.vmem [resolvable:$true] %s23
      %29 = dma.hbm_to_vmem [thread:$0]  %s2, 8192, %s24, [#allocation5], 512, 512, 32
    $region13: #{tpu_custom_call.1} parent=1 // pred_fallthru
      _
    // Predicated region
    $region14: #{tpu_custom_call.1} parent=1 // pred_check
      _
    $region15: #{tpu_custom_call.1} parent=1 // pred_check_branch
      %31 = sbr.rel (0) target = $region17
    $region16: #{tpu_custom_call.1} parent=1 // pred_region
      _
    $region17: #{tpu_custom_call.1} parent=1 // pred_fallthru
      _
    // Predicated region
    $region18: #{tpu_custom_call.1} parent=1 // pred_check
      _
    $region19: #{tpu_custom_call.1} parent=1 // pred_check_branch
      %33 = sbr.rel (0) target = $region21
    $region20: #{tpu_custom_call.1} parent=1 // pred_region
      _
    $region21: #{tpu_custom_call.1} parent=1 // pred_fallthru
      _
    // Predicated region
    $region22: #{tpu_custom_call.1} parent=1 // pred_check
      _
    $region23: #{tpu_custom_call.1} parent=1 // pred_check_branch
      %35 = sbr.rel (0) target = $region25
    $region24: #{tpu_custom_call.1} parent=1 // pred_region
      _
    $region25: #{tpu_custom_call.1} parent=1 // pred_fallthru
      _
    // Predicated region
    $region26: #{tpu_custom_call.1} parent=1 // pred_check
      _
    $region27: #{tpu_custom_call.1} parent=1 // pred_check_branch
      %37 = sbr.rel (0) target = $region29
    $region28: #{tpu_custom_call.1} parent=1 // pred_region
      %38 = dma.done [#allocation5], 8192
    $region29: #{tpu_custom_call.1} parent=1 // pred_fallthru
      _
    %v39 = vld [vmem:[#allocation4] sm:$0xff]
    %v40 = vld [vmem:[#allocation4 + $0x8] sm:$0xff]
    %v41 = vld [vmem:[#allocation4 + $0x10] sm:$0xff]
    %v42 = vld [vmem:[#allocation4 + $0x18] sm:$0xff]
    %v43 = vld [vmem:[#allocation4 + $0x20] sm:$0xff]
    %v44 = vld [vmem:[#allocation4 + $0x28] sm:$0xff]
    %v45 = vld [vmem:[#allocation4 + $0x30] sm:$0xff]
    %v46 = vld [vmem:[#allocation4 + $0x38] sm:$0xff]
    %v47 = vld [vmem:[#allocation4 + $0x40] sm:$0xff]
    %v48 = vld [vmem:[#allocation4 + $0x48] sm:$0xff]
    %v49 = vld [vmem:[#allocation4 + $0x50] sm:$0xff]
    %v50 = vld [vmem:[#allocation4 + $0x58] sm:$0xff]
    %v51 = vld [vmem:[#allocation4 + $0x60] sm:$0xff]
    %v52 = vld [vmem:[#allocation4 + $0x68] sm:$0xff]
    %v53 = vld [vmem:[#allocation4 + $0x70] sm:$0xff]
    %v54 = vld [vmem:[#allocation4 + $0x78] sm:$0xff]
    %v55 = vld [vmem:[#allocation4 + $0x80] sm:$0xff]
    %v56 = vld [vmem:[#allocation4 + $0x88] sm:$0xff]
    %v57 = vld [vmem:[#allocation4 + $0x90] sm:$0xff]
    %v58 = vld [vmem:[#allocation4 + $0x98] sm:$0xff]
    %v59 = vld [vmem:[#allocation4 + $0xa0] sm:$0xff]
    %v60 = vld [vmem:[#allocation4 + $0xa8] sm:$0xff]
    %v61 = vld [vmem:[#allocation4 + $0xb0] sm:$0xff]
    %v62 = vld [vmem:[#allocation4 + $0xb8] sm:$0xff]
    %v63 = vld [vmem:[#allocation4 + $0xc0] sm:$0xff]
    %v64 = vld [vmem:[#allocation4 + $0xc8] sm:$0xff]
    %v65 = vld [vmem:[#allocation4 + $0xd0] sm:$0xff]
    %v66 = vld [vmem:[#allocation4 + $0xd8] sm:$0xff]
    %v67 = vld [vmem:[#allocation4 + $0xe0] sm:$0xff]
    %v68 = vld [vmem:[#allocation4 + $0xe8] sm:$0xff]
    %v69 = vld [vmem:[#allocation4 + $0xf0] sm:$0xff]
    %v70 = vld [vmem:[#allocation4 + $0xf8] sm:$0xff]
    %v71 = vld [vmem:[#allocation4 + $0x100] sm:$0xff]
    %v72 = vld [vmem:[#allocation4 + $0x108] sm:$0xff]
    %v73 = vld [vmem:[#allocation4 + $0x110] sm:$0xff]
    %v74 = vld [vmem:[#allocation4 + $0x118] sm:$0xff]
    %v75 = vld [vmem:[#allocation4 + $0x120] sm:$0xff]
    %v76 = vld [vmem:[#allocation4 + $0x128] sm:$0xff]
    %v77 = vld [vmem:[#allocation4 + $0x130] sm:$0xff]
    %v78 = vld [vmem:[#allocation4 + $0x138] sm:$0xff]
    %v79 = vld [vmem:[#allocation4 + $0x140] sm:$0xff]
    %v80 = vld [vmem:[#allocation4 + $0x148] sm:$0xff]
    %v81 = vld [vmem:[#allocation4 + $0x150] sm:$0xff]
    %v82 = vld [vmem:[#allocation4 + $0x158] sm:$0xff]
    %v83 = vld [vmem:[#allocation4 + $0x160] sm:$0xff]
    %v84 = vld [vmem:[#allocation4 + $0x168] sm:$0xff]
    %v85 = vld [vmem:[#allocation4 + $0x170] sm:$0xff]
    %v86 = vld [vmem:[#allocation4 + $0x178] sm:$0xff]
    %v87 = vld [vmem:[#allocation4 + $0x180] sm:$0xff]
    %v88 = vld [vmem:[#allocation4 + $0x188] sm:$0xff]
    %v89 = vld [vmem:[#allocation4 + $0x190] sm:$0xff]
    %v90 = vld [vmem:[#allocation4 + $0x198] sm:$0xff]
    %v91 = vld [vmem:[#allocation4 + $0x1a0] sm:$0xff]
    %v92 = vld [vmem:[#allocation4 + $0x1a8] sm:$0xff]
    %v93 = vld [vmem:[#allocation4 + $0x1b0] sm:$0xff]
    %v94 = vld [vmem:[#allocation4 + $0x1b8] sm:$0xff]
    %v95 = vld [vmem:[#allocation4 + $0x1c0] sm:$0xff]
    %v96 = vld [vmem:[#allocation4 + $0x1c8] sm:$0xff]
    %v97 = vld [vmem:[#allocation4 + $0x1d0] sm:$0xff]
    %v98 = vld [vmem:[#allocation4 + $0x1d8] sm:$0xff]
    %v99 = vld [vmem:[#allocation4 + $0x1e0] sm:$0xff]
    %v100 = vld [vmem:[#allocation4 + $0x1e8] sm:$0xff]
    %v101 = vld [vmem:[#allocation4 + $0x1f0] sm:$0xff]
    %v102 = vld [vmem:[#allocation4 + $0x1f8] sm:$0xff]
    %v103 = vld [vmem:[%s1] sm:$0xf]
    %v104 = vld [vmem:[%s3] sm:$0xf]
    %v105 = vld [vmem:[%s0] sm:$0x3]
    %107 = vset.pattern.permute.xlu0 0
    %108 = vperm.xlu0 %107, %v105
    %v109 = vpop.permute.xlu0 %108
    %v112 = vlaneseq
    %v113 = vshrl.u32 %v112, 7
    %v114 = vsub.s32 0, %v113
    %v115 = vrot.slane %v103, %v114
    %v116 = vlaneseq
    %v117 = vshrl.u32 %v116, 7
    %v118 = vsub.s32 1, %v117
    %v119 = vrot.slane %v103, %v118
    %v120 = vlaneseq
    %v121 = vshrl.u32 %v120, 7
    %v122 = vsub.s32 2, %v121
    %v123 = vrot.slane %v103, %v122
    %v124 = vlaneseq
    %v125 = vshrl.u32 %v124, 7
    %v126 = vsub.s32 3, %v125
    %v127 = vrot.slane %v103, %v126
    %v132 = vmul.f32 %v109, %v115
    %v133 = vmul.f32 %v109, %v119
    %v134 = vmul.f32 %v109, %v123
    %v135 = vmul.f32 %v109, %v127
    %v137 = vlaneseq
    %v138 = vshrl.u32 %v137, 7
    %v139 = vsub.s32 0, %v138
    %v140 = vrot.slane %v104, %v139
    %v141 = vlaneseq
    %v142 = vshrl.u32 %v141, 7
    %v143 = vsub.s32 1, %v142
    %v144 = vrot.slane %v104, %v143
    %v145 = vlaneseq
    %v146 = vshrl.u32 %v145, 7
    %v147 = vsub.s32 2, %v146
    %v148 = vrot.slane %v104, %v147
    %v149 = vlaneseq
    %v150 = vshrl.u32 %v149, 7
    %v151 = vsub.s32 3, %v150
    %v152 = vrot.slane %v104, %v151
    %v157 = vadd.f32 %v140, %v132
    %v158 = vadd.f32 %v144, %v133
    %v159 = vadd.f32 %v148, %v134
    %v160 = vadd.f32 %v152, %v135
    %161 = vmatprep.subr.mxu0 %v100
    %162 = vmatpush1.msra.mxu0 %v99
    %163 = vmatprep.subr.mxu0 %v96
    %164 = vmatpush1.msra.mxu0 %v95
    %165 = vmatprep.subr.mxu0 %v92
    %166 = vmatpush1.msra.mxu0 %v91
    %167 = vmatprep.subr.mxu0 %v88
    %168 = vmatpush1.msra.mxu0 %v87
    %169 = vmatprep.subr.mxu0 %v84
    %170 = vmatpush1.msra.mxu0 %v83
    %171 = vmatprep.subr.mxu0 %v80
    %172 = vmatpush1.msra.mxu0 %v79
    %173 = vmatprep.subr.mxu0 %v76
    %174 = vmatpush1.msra.mxu0 %v75
    %175 = vmatprep.subr.mxu0 %v72
    %176 = vmatpush1.msra.mxu0 %v71
    %177 = vmatprep.subr.mxu0 %v68
    %178 = vmatpush1.msra.mxu0 %v67
    %179 = vmatprep.subr.mxu0 %v64
    %180 = vmatpush1.msra.mxu0 %v63
    %181 = vmatprep.subr.mxu0 %v60
    %182 = vmatpush1.msra.mxu0 %v59
    %183 = vmatprep.subr.mxu0 %v56
    %184 = vmatpush1.msra.mxu0 %v55
    %185 = vmatprep.subr.mxu0 %v52
    %186 = vmatpush1.msra.mxu0 %v51
    %187 = vmatprep.subr.mxu0 %v48
    %188 = vmatpush1.msra.mxu0 %v47
    %189 = vmatprep.subr.mxu0 %v44
    %190 = vmatpush1.msra.mxu0 %v43
    %191 = vmatprep.subr.mxu0 %v40
    %192 = vmatpush1.msra.mxu0 %v39
    %193 = vmatprep.subr.mxu0 0.0
    %194 = vmatpush2.msra.mxu0 0.0
    %195 = vmatprep.subr.mxu0 0.0
    %196 = vmatpush2.msra.mxu0 0.0
    %197 = vmatprep.subr.mxu0 0.0
    %198 = vmatpush2.msra.mxu0 0.0
    %199 = vmatprep.subr.mxu0 0.0
    %200 = vmatpush2.msra.mxu0 0.0
    %201 = vmatprep.subr.mxu0 0.0
    %202 = vmatpush2.msra.mxu0 0.0
    %203 = vmatprep.subr.mxu0 0.0
    %204 = vmatpush2.msra.mxu0 0.0
    %205 = vmatprep.subr.mxu0 0.0
    %206 = vmatpush2.msra.mxu0 0.0
    %207 = vmatprep.subr.mxu0 0.0
    %208 = vmatpush2.msra.mxu0 0.0
    %209 = vmatprep.subr.mxu0 0.0
    %210 = vmatpush2.msra.mxu0 0.0
    %211 = vmatprep.subr.mxu0 0.0
    %212 = vmatpush2.msra.mxu0 0.0
    %213 = vmatprep.subr.mxu0 0.0
    %214 = vmatpush2.msra.mxu0 0.0
    %215 = vmatprep.subr.mxu0 0.0
    %216 = vmatpush2.msra.mxu0 0.0
    %217 = vmatprep.subr.mxu0 0.0
    %218 = vmatpush2.msra.mxu0 0.0
    %219 = vmatprep.subr.mxu0 0.0
    %220 = vmatpush2.msra.mxu0 0.0
    %221 = vmatprep.subr.mxu0 0.0
    %222 = vmatpush2.msra.mxu0 0.0
    %223 = vmatprep.subr.mxu0 0.0
    %224 = vmatpush2.msra.mxu0 0.0
    %225 = vmatprep.mubr.f32.mxu0 0.0
    %226 = vmatmul.mubr.f32.gmra.mxu0 0.0
    %v227 = vpop.f32.mrf.mxu0
    %v228 = vadd.f32 %v157, %v227
    %v229 = vpop.f32.mrf.mxu0
    %v230 = vadd.f32 %v158, %v229
    %231 = vdwg.mxu0
    %232 = vmatprep.subr.mxu0 %v102
    %233 = vmatpush1.msra.mxu0 %v101
    %234 = vmatprep.subr.mxu0 %v98
    %235 = vmatpush1.msra.mxu0 %v97
    %236 = vmatprep.subr.mxu0 %v94
    %237 = vmatpush1.msra.mxu0 %v93
    %238 = vmatprep.subr.mxu0 %v90
    %239 = vmatpush1.msra.mxu0 %v89
    %240 = vmatprep.subr.mxu0 %v86
    %241 = vmatpush1.msra.mxu0 %v85
    %242 = vmatprep.subr.mxu0 %v82
    %243 = vmatpush1.msra.mxu0 %v81
    %244 = vmatprep.subr.mxu0 %v78
    %245 = vmatpush1.msra.mxu0 %v77
    %246 = vmatprep.subr.mxu0 %v74
    %247 = vmatpush1.msra.mxu0 %v73
    %248 = vmatprep.subr.mxu0 %v70
    %249 = vmatpush1.msra.mxu0 %v69
    %250 = vmatprep.subr.mxu0 %v66
    %251 = vmatpush1.msra.mxu0 %v65
    %252 = vmatprep.subr.mxu0 %v62
    %253 = vmatpush1.msra.mxu0 %v61
    %254 = vmatprep.subr.mxu0 %v58
    %255 = vmatpush1.msra.mxu0 %v57
    %256 = vmatprep.subr.mxu0 %v54
    %257 = vmatpush1.msra.mxu0 %v53
    %258 = vmatprep.subr.mxu0 %v50
    %259 = vmatpush1.msra.mxu0 %v49
    %260 = vmatprep.subr.mxu0 %v46
    %261 = vmatpush1.msra.mxu0 %v45
    %262 = vmatprep.subr.mxu0 %v42
    %263 = vmatpush1.msra.mxu0 %v41
    %264 = vmatprep.subr.mxu0 0.0
    %265 = vmatpush2.msra.mxu0 0.0
    %266 = vmatprep.subr.mxu0 0.0
    %267 = vmatpush2.msra.mxu0 0.0
    %268 = vmatprep.subr.mxu0 0.0
    %269 = vmatpush2.msra.mxu0 0.0
    %270 = vmatprep.subr.mxu0 0.0
    %271 = vmatpush2.msra.mxu0 0.0
    %272 = vmatprep.subr.mxu0 0.0
    %273 = vmatpush2.msra.mxu0 0.0
    %274 = vmatprep.subr.mxu0 0.0
    %275 = vmatpush2.msra.mxu0 0.0
    %276 = vmatprep.subr.mxu0 0.0
    %277 = vmatpush2.msra.mxu0 0.0
    %278 = vmatprep.subr.mxu0 0.0
    %279 = vmatpush2.msra.mxu0 0.0
    %280 = vmatprep.subr.mxu0 0.0
    %281 = vmatpush2.msra.mxu0 0.0
    %282 = vmatprep.subr.mxu0 0.0
    %283 = vmatpush2.msra.mxu0 0.0
    %284 = vmatprep.subr.mxu0 0.0
    %285 = vmatpush2.msra.mxu0 0.0
    %286 = vmatprep.subr.mxu0 0.0
    %287 = vmatpush2.msra.mxu0 0.0
    %288 = vmatprep.subr.mxu0 0.0
    %289 = vmatpush2.msra.mxu0 0.0
    %290 = vmatprep.subr.mxu0 0.0
    %291 = vmatpush2.msra.mxu0 0.0
    %292 = vmatprep.subr.mxu0 0.0
    %293 = vmatpush2.msra.mxu0 0.0
    %294 = vmatprep.subr.mxu0 0.0
    %295 = vmatpush2.msra.mxu0 0.0
    %296 = vmatprep.mubr.f32.mxu0 0.0
    %297 = vmatmul.mubr.f32.gmra.mxu0 0.0
    %v298 = vpop.f32.mrf.mxu0
    %v299 = vadd.f32 %v159, %v298
    %v300 = vpop.f32.mrf.mxu0
    %v301 = vadd.f32 %v160, %v300
    %302 = vdwg.mxu0
    %v303 = vmul.f32 %v228, 0.5
    %v304 = vtanh.pop %v303
    %v305 = vmul.f32 %v304, 0.5
    %v306 = vadd.f32 %v305, 0.5
    %v307 = vmul.f32 %v230, 0.5
    %v308 = vtanh.pop %v307
    %v309 = vmul.f32 %v308, 0.5
    %v310 = vadd.f32 %v309, 0.5
    %v311 = vtanh.pop %v299
    %v312 = vmul.f32 %v301, 0.5
    %v313 = vtanh.pop %v312
    %v314 = vmul.f32 %v313, 0.5
    %v315 = vadd.f32 %v314, 0.5
    %v316 = vmul.f32 %v310, 0.0
    %v317 = vmul.f32 %v306, %v311
    %v318 = vadd.f32 %v316, %v317
    %v319 = vtanh.pop %v318
    %v320 = vmul.f32 %v315, %v319
    %321 = vst [vmem:[#allocation2] sm:$0x3] %v320
    %s322 = scalar_lea.vmem %s0, 2
    %v323 = vld [vmem:[%s322] sm:$0x3]
    %325 = vset.pattern.permute.xlu0 0
    %326 = vperm.xlu0 %325, %v323
    %v327 = vpop.permute.xlu0 %326
    %v329 = vmul.f32 %v327, %v115
    %v330 = vmul.f32 %v327, %v119
    %v331 = vmul.f32 %v327, %v123
    %v332 = vmul.f32 %v327, %v127
    %v333 = vadd.f32 %v140, %v329
    %v334 = vadd.f32 %v144, %v330
    %v335 = vadd.f32 %v148, %v331
    %v336 = vadd.f32 %v152, %v332
    %337 = vmatprep.subr.mxu0 %v100
    %338 = vmatpush1.msra.mxu0 %v99
    %339 = vmatprep.subr.mxu0 %v96
    %340 = vmatpush1.msra.mxu0 %v95
    %341 = vmatprep.subr.mxu0 %v92
    %342 = vmatpush1.msra.mxu0 %v91
    %343 = vmatprep.subr.mxu0 %v88
    %344 = vmatpush1.msra.mxu0 %v87
    %345 = vmatprep.subr.mxu0 %v84
    %346 = vmatpush1.msra.mxu0 %v83
    %347 = vmatprep.subr.mxu0 %v80
    %348 = vmatpush1.msra.mxu0 %v79
    %349 = vmatprep.subr.mxu0 %v76
    %350 = vmatpush1.msra.mxu0 %v75
    %351 = vmatprep.subr.mxu0 %v72
    %352 = vmatpush1.msra.mxu0 %v71
    %353 = vmatprep.subr.mxu0 %v68
    %354 = vmatpush1.msra.mxu0 %v67
    %355 = vmatprep.subr.mxu0 %v64
    %356 = vmatpush1.msra.mxu0 %v63
    %357 = vmatprep.subr.mxu0 %v60
    %358 = vmatpush1.msra.mxu0 %v59
    %359 = vmatprep.subr.mxu0 %v56
    %360 = vmatpush1.msra.mxu0 %v55
    %361 = vmatprep.subr.mxu0 %v52
    %362 = vmatpush1.msra.mxu0 %v51
    %363 = vmatprep.subr.mxu0 %v48
    %364 = vmatpush1.msra.mxu0 %v47
    %365 = vmatprep.subr.mxu0 %v44
    %366 = vmatpush1.msra.mxu0 %v43
    %367 = vmatprep.subr.mxu0 %v40
    %368 = vmatpush1.msra.mxu0 %v39
    %369 = vmatprep.subr.mxu0 0.0
    %370 = vmatpush2.msra.mxu0 0.0
    %371 = vmatprep.subr.mxu0 0.0
    %372 = vmatpush2.msra.mxu0 0.0
    %373 = vmatprep.subr.mxu0 0.0
    %374 = vmatpush2.msra.mxu0 0.0
    %375 = vmatprep.subr.mxu0 0.0
    %376 = vmatpush2.msra.mxu0 0.0
    %377 = vmatprep.subr.mxu0 0.0
    %378 = vmatpush2.msra.mxu0 0.0
    %379 = vmatprep.subr.mxu0 0.0
    %380 = vmatpush2.msra.mxu0 0.0
    %381 = vmatprep.subr.mxu0 0.0
    %382 = vmatpush2.msra.mxu0 0.0
    %383 = vmatprep.subr.mxu0 0.0
    %384 = vmatpush2.msra.mxu0 0.0
    %385 = vmatprep.subr.mxu0 0.0
    %386 = vmatpush2.msra.mxu0 0.0
    %387 = vmatprep.subr.mxu0 0.0
    %388 = vmatpush2.msra.mxu0 0.0
    %389 = vmatprep.subr.mxu0 0.0
    %390 = vmatpush2.msra.mxu0 0.0
    %391 = vmatprep.subr.mxu0 0.0
    %392 = vmatpush2.msra.mxu0 0.0
    %393 = vmatprep.subr.mxu0 0.0
    %394 = vmatpush2.msra.mxu0 0.0
    %395 = vmatprep.subr.mxu0 0.0
    %396 = vmatpush2.msra.mxu0 0.0
    %397 = vmatprep.subr.mxu0 0.0
    %398 = vmatpush2.msra.mxu0 0.0
    %399 = vmatprep.subr.mxu0 0.0
    %400 = vmatpush2.msra.mxu0 0.0
    %401 = vmatprep.mubr.f32.mxu0 0.0
    %402 = vmatmul.mubr.f32.gmra.mxu0 %v320
    %v403 = vpop.f32.mrf.mxu0
    %v404 = vadd.f32 %v333, %v403
    %v405 = vpop.f32.mrf.mxu0
    %v406 = vadd.f32 %v334, %v405
    %407 = vdwg.mxu0
    %408 = vmatprep.subr.mxu0 %v102
    %409 = vmatpush1.msra.mxu0 %v101
    %410 = vmatprep.subr.mxu0 %v98
    %411 = vmatpush1.msra.mxu0 %v97
    %412 = vmatprep.subr.mxu0 %v94
    %413 = vmatpush1.msra.mxu0 %v93
    %414 = vmatprep.subr.mxu0 %v90
    %415 = vmatpush1.msra.mxu0 %v89
    %416 = vmatprep.subr.mxu0 %v86
    %417 = vmatpush1.msra.mxu0 %v85
    %418 = vmatprep.subr.mxu0 %v82
    %419 = vmatpush1.msra.mxu0 %v81
    %420 = vmatprep.subr.mxu0 %v78
    %421 = vmatpush1.msra.mxu0 %v77
    %422 = vmatprep.subr.mxu0 %v74
    %423 = vmatpush1.msra.mxu0 %v73
    %424 = vmatprep.subr.mxu0 %v70
    %425 = vmatpush1.msra.mxu0 %v69
    %426 = vmatprep.subr.mxu0 %v66
    %427 = vmatpush1.msra.mxu0 %v65
    %428 = vmatprep.subr.mxu0 %v62
    %429 = vmatpush1.msra.mxu0 %v61
    %430 = vmatprep.subr.mxu0 %v58
    %431 = vmatpush1.msra.mxu0 %v57
    %432 = vmatprep.subr.mxu0 %v54
    %433 = vmatpush1.msra.mxu0 %v53
    %434 = vmatprep.subr.mxu0 %v50
    %435 = vmatpush1.msra.mxu0 %v49
    %436 = vmatprep.subr.mxu0 %v46
    %437 = vmatpush1.msra.mxu0 %v45
    %438 = vmatprep.subr.mxu0 %v42
    %439 = vmatpush1.msra.mxu0 %v41
    %440 = vmatprep.subr.mxu0 0.0
    %441 = vmatpush2.msra.mxu0 0.0
    %442 = vmatprep.subr.mxu0 0.0
    %443 = vmatpush2.msra.mxu0 0.0
    %444 = vmatprep.subr.mxu0 0.0
    %445 = vmatpush2.msra.mxu0 0.0
    %446 = vmatprep.subr.mxu0 0.0
    %447 = vmatpush2.msra.mxu0 0.0
    %448 = vmatprep.subr.mxu0 0.0
    %449 = vmatpush2.msra.mxu0 0.0
    %450 = vmatprep.subr.mxu0 0.0
    %451 = vmatpush2.msra.mxu0 0.0
    %452 = vmatprep.subr.mxu0 0.0
    %453 = vmatpush2.msra.mxu0 0.0
    %454 = vmatprep.subr.mxu0 0.0
    %455 = vmatpush2.msra.mxu0 0.0
    %456 = vmatprep.subr.mxu0 0.0
    %457 = vmatpush2.msra.mxu0 0.0
    %458 = vmatprep.subr.mxu0 0.0
    %459 = vmatpush2.msra.mxu0 0.0
    %460 = vmatprep.subr.mxu0 0.0
    %461 = vmatpush2.msra.mxu0 0.0
    %462 = vmatprep.subr.mxu0 0.0
    %463 = vmatpush2.msra.mxu0 0.0
    %464 = vmatprep.subr.mxu0 0.0
    %465 = vmatpush2.msra.mxu0 0.0
    %466 = vmatprep.subr.mxu0 0.0
    %467 = vmatpush2.msra.mxu0 0.0
    %468 = vmatprep.subr.mxu0 0.0
    %469 = vmatpush2.msra.mxu0 0.0
    %470 = vmatprep.subr.mxu0 0.0
    %471 = vmatpush2.msra.mxu0 0.0
    %472 = vmatprep.mubr.f32.mxu0 0.0
    %473 = vmatmul.mubr.f32.gmra.mxu0 %v320
    %v474 = vpop.f32.mrf.mxu0
    %v475 = vadd.f32 %v335, %v474
    %v476 = vpop.f32.mrf.mxu0
    %v477 = vadd.f32 %v336, %v476
    %478 = vdwg.mxu0
    %v479 = vmul.f32 %v404, 0.5
    %v480 = vtanh.pop %v479
    %v481 = vmul.f32 %v480, 0.5
    %v482 = vadd.f32 %v481, 0.5
    %v483 = vmul.f32 %v406, 0.5
    %v484 = vtanh.pop %v483
    %v485 = vmul.f32 %v484, 0.5
    %v486 = vadd.f32 %v485, 0.5
    %v487 = vtanh.pop %v475
    %v488 = vmul.f32 %v477, 0.5
    %v489 = vtanh.pop %v488
    %v490 = vmul.f32 %v489, 0.5
    %v491 = vadd.f32 %v490, 0.5
    %v492 = vmul.f32 %v486, %v318
    %v493 = vmul.f32 %v482, %v487
    %v494 = vadd.f32 %v492, %v493
    %v495 = vtanh.pop %v494
    %v496 = vmul.f32 %v491, %v495
    %s497 = scalar_lea.vmem [#allocation2], 2
    %498 = vst [vmem:[%s497] sm:$0x3] %v496
    %s499 = scalar_lea.vmem %s0, 4
    %v500 = vld [vmem:[%s499] sm:$0x3]
    %502 = vset.pattern.permute.xlu0 0
    %503 = vperm.xlu0 %502, %v500
    %v504 = vpop.permute.xlu0 %503
    %v506 = vmul.f32 %v504, %v115
    %v507 = vmul.f32 %v504, %v119
    %v508 = vmul.f32 %v504, %v123
    %v509 = vmul.f32 %v504, %v127
    %v510 = vadd.f32 %v140, %v506
    %v511 = vadd.f32 %v144, %v507
    %v512 = vadd.f32 %v148, %v508
    %v513 = vadd.f32 %v152, %v509
    %514 = vmatprep.subr.mxu0 %v100
    %515 = vmatpush1.msra.mxu0 %v99
    %516 = vmatprep.subr.mxu0 %v96
    %517 = vmatpush1.msra.mxu0 %v95
    %518 = vmatprep.subr.mxu0 %v92
    %519 = vmatpush1.msra.mxu0 %v91
    %520 = vmatprep.subr.mxu0 %v88
    %521 = vmatpush1.msra.mxu0 %v87
    %522 = vmatprep.subr.mxu0 %v84
    %523 = vmatpush1.msra.mxu0 %v83
    %524 = vmatprep.subr.mxu0 %v80
    %525 = vmatpush1.msra.mxu0 %v79
    %526 = vmatprep.subr.mxu0 %v76
    %527 = vmatpush1.msra.mxu0 %v75
    %528 = vmatprep.subr.mxu0 %v72
    %529 = vmatpush1.msra.mxu0 %v71
    %530 = vmatprep.subr.mxu0 %v68
    %531 = vmatpush1.msra.mxu0 %v67
    %532 = vmatprep.subr.mxu0 %v64
    %533 = vmatpush1.msra.mxu0 %v63
    %534 = vmatprep.subr.mxu0 %v60
    %535 = vmatpush1.msra.mxu0 %v59
    %536 = vmatprep.subr.mxu0 %v56
    %537 = vmatpush1.msra.mxu0 %v55
    %538 = vmatprep.subr.mxu0 %v52
    %539 = vmatpush1.msra.mxu0 %v51
    %540 = vmatprep.subr.mxu0 %v48
    %541 = vmatpush1.msra.mxu0 %v47
    %542 = vmatprep.subr.mxu0 %v44
    %543 = vmatpush1.msra.mxu0 %v43
    %544 = vmatprep.subr.mxu0 %v40
    %545 = vmatpush1.msra.mxu0 %v39
    %546 = vmatprep.subr.mxu0 0.0
    %547 = vmatpush2.msra.mxu0 0.0
    %548 = vmatprep.subr.mxu0 0.0
    %549 = vmatpush2.msra.mxu0 0.0
    %550 = vmatprep.subr.mxu0 0.0
    %551 = vmatpush2.msra.mxu0 0.0
    %552 = vmatprep.subr.mxu0 0.0
    %553 = vmatpush2.msra.mxu0 0.0
    %554 = vmatprep.subr.mxu0 0.0
    %555 = vmatpush2.msra.mxu0 0.0
    %556 = vmatprep.subr.mxu0 0.0
    %557 = vmatpush2.msra.mxu0 0.0
    %558 = vmatprep.subr.mxu0 0.0
    %559 = vmatpush2.msra.mxu0 0.0
    %560 = vmatprep.subr.mxu0 0.0
    %561 = vmatpush2.msra.mxu0 0.0
    %562 = vmatprep.subr.mxu0 0.0
    %563 = vmatpush2.msra.mxu0 0.0
    %564 = vmatprep.subr.mxu0 0.0
    %565 = vmatpush2.msra.mxu0 0.0
    %566 = vmatprep.subr.mxu0 0.0
    %567 = vmatpush2.msra.mxu0 0.0
    %568 = vmatprep.subr.mxu0 0.0
    %569 = vmatpush2.msra.mxu0 0.0
    %570 = vmatprep.subr.mxu0 0.0
    %571 = vmatpush2.msra.mxu0 0.0
    %572 = vmatprep.subr.mxu0 0.0
    %573 = vmatpush2.msra.mxu0 0.0
    %574 = vmatprep.subr.mxu0 0.0
    %575 = vmatpush2.msra.mxu0 0.0
    %576 = vmatprep.subr.mxu0 0.0
    %577 = vmatpush2.msra.mxu0 0.0
    %578 = vmatprep.mubr.f32.mxu0 0.0
    %579 = vmatmul.mubr.f32.gmra.mxu0 %v496
    %v580 = vpop.f32.mrf.mxu0
    %v581 = vadd.f32 %v510, %v580
    %v582 = vpop.f32.mrf.mxu0
    %v583 = vadd.f32 %v511, %v582
    %584 = vdwg.mxu0
    %585 = vmatprep.subr.mxu0 %v102
    %586 = vmatpush1.msra.mxu0 %v101
    %587 = vmatprep.subr.mxu0 %v98
    %588 = vmatpush1.msra.mxu0 %v97
    %589 = vmatprep.subr.mxu0 %v94
    %590 = vmatpush1.msra.mxu0 %v93
    %591 = vmatprep.subr.mxu0 %v90
    %592 = vmatpush1.msra.mxu0 %v89
    %593 = vmatprep.subr.mxu0 %v86
    %594 = vmatpush1.msra.mxu0 %v85
    %595 = vmatprep.subr.mxu0 %v82
    %596 = vmatpush1.msra.mxu0 %v81
    %597 = vmatprep.subr.mxu0 %v78
    %598 = vmatpush1.msra.mxu0 %v77
    %599 = vmatprep.subr.mxu0 %v74
    %600 = vmatpush1.msra.mxu0 %v73
    %601 = vmatprep.subr.mxu0 %v70
    %602 = vmatpush1.msra.mxu0 %v69
    %603 = vmatprep.subr.mxu0 %v66
    %604 = vmatpush1.msra.mxu0 %v65
    %605 = vmatprep.subr.mxu0 %v62
    %606 = vmatpush1.msra.mxu0 %v61
    %607 = vmatprep.subr.mxu0 %v58
    %608 = vmatpush1.msra.mxu0 %v57
    %609 = vmatprep.subr.mxu0 %v54
    %610 = vmatpush1.msra.mxu0 %v53
    %611 = vmatprep.subr.mxu0 %v50
    %612 = vmatpush1.msra.mxu0 %v49
    %613 = vmatprep.subr.mxu0 %v46
    %614 = vmatpush1.msra.mxu0 %v45
    %615 = vmatprep.subr.mxu0 %v42
    %616 = vmatpush1.msra.mxu0 %v41
    %617 = vmatprep.subr.mxu0 0.0
    %618 = vmatpush2.msra.mxu0 0.0
    %619 = vmatprep.subr.mxu0 0.0
    %620 = vmatpush2.msra.mxu0 0.0
    %621 = vmatprep.subr.mxu0 0.0
    %622 = vmatpush2.msra.mxu0 0.0
    %623 = vmatprep.subr.mxu0 0.0
    %624 = vmatpush2.msra.mxu0 0.0
    %625 = vmatprep.subr.mxu0 0.0
    %626 = vmatpush2.msra.mxu0 0.0
    %627 = vmatprep.subr.mxu0 0.0
    %628 = vmatpush2.msra.mxu0 0.0
    %629 = vmatprep.subr.mxu0 0.0
    %630 = vmatpush2.msra.mxu0 0.0
    %631 = vmatprep.subr.mxu0 0.0
    %632 = vmatpush2.msra.mxu0 0.0
    %633 = vmatprep.subr.mxu0 0.0
    %634 = vmatpush2.msra.mxu0 0.0
    %635 = vmatprep.subr.mxu0 0.0
    %636 = vmatpush2.msra.mxu0 0.0
    %637 = vmatprep.subr.mxu0 0.0
    %638 = vmatpush2.msra.mxu0 0.0
    %639 = vmatprep.subr.mxu0 0.0
    %640 = vmatpush2.msra.mxu0 0.0
    %641 = vmatprep.subr.mxu0 0.0
    %642 = vmatpush2.msra.mxu0 0.0
    %643 = vmatprep.subr.mxu0 0.0
    %644 = vmatpush2.msra.mxu0 0.0
    %645 = vmatprep.subr.mxu0 0.0
    %646 = vmatpush2.msra.mxu0 0.0
    %647 = vmatprep.subr.mxu0 0.0
    %648 = vmatpush2.msra.mxu0 0.0
    %649 = vmatprep.mubr.f32.mxu0 0.0
    %650 = vmatmul.mubr.f32.gmra.mxu0 %v496
    %v651 = vpop.f32.mrf.mxu0
    %v652 = vadd.f32 %v512, %v651
    %v653 = vpop.f32.mrf.mxu0
    %v654 = vadd.f32 %v513, %v653
    %655 = vdwg.mxu0
    %v656 = vmul.f32 %v581, 0.5
    %v657 = vtanh.pop %v656
    %v658 = vmul.f32 %v657, 0.5
    %v659 = vadd.f32 %v658, 0.5
    %v660 = vmul.f32 %v583, 0.5
    %v661 = vtanh.pop %v660
    %v662 = vmul.f32 %v661, 0.5
    %v663 = vadd.f32 %v662, 0.5
    %v664 = vtanh.pop %v652
    %v665 = vmul.f32 %v654, 0.5
    %v666 = vtanh.pop %v665
    %v667 = vmul.f32 %v666, 0.5
    %v668 = vadd.f32 %v667, 0.5
    %v669 = vmul.f32 %v663, %v494
    %v670 = vmul.f32 %v659, %v664
    %v671 = vadd.f32 %v669, %v670
    %v672 = vtanh.pop %v671
    %v673 = vmul.f32 %v668, %v672
    %s674 = scalar_lea.vmem [#allocation2], 4
    %675 = vst [vmem:[%s674] sm:$0x3] %v673
    %s676 = scalar_lea.vmem %s0, 6
    %v677 = vld [vmem:[%s676] sm:$0x3]
    %679 = vset.pattern.permute.xlu0 0
    %680 = vperm.xlu0 %679, %v677
    %v681 = vpop.permute.xlu0 %680
    %v683 = vmul.f32 %v681, %v115
    %v684 = vmul.f32 %v681, %v119
    %v685 = vmul.f32 %v681, %v123
    %v686 = vmul.f32 %v681, %v127
    %v687 = vadd.f32 %v140, %v683
    %v688 = vadd.f32 %v144, %v684
    %v689 = vadd.f32 %v148, %v685
    %v690 = vadd.f32 %v152, %v686
    %691 = vmatprep.subr.mxu0 %v100
    %692 = vmatpush1.msra.mxu0 %v99
    %693 = vmatprep.subr.mxu0 %v96
    %694 = vmatpush1.msra.mxu0 %v95
    %695 = vmatprep.subr.mxu0 %v92
    %696 = vmatpush1.msra.mxu0 %v91
    %697 = vmatprep.subr.mxu0 %v88
    %698 = vmatpush1.msra.mxu0 %v87
    %699 = vmatprep.subr.mxu0 %v84
    %700 = vmatpush1.msra.mxu0 %v83
    %701 = vmatprep.subr.mxu0 %v80
    %702 = vmatpush1.msra.mxu0 %v79
    %703 = vmatprep.subr.mxu0 %v76
    %704 = vmatpush1.msra.mxu0 %v75
    %705 = vmatprep.subr.mxu0 %v72
    %706 = vmatpush1.msra.mxu0 %v71
    %707 = vmatprep.subr.mxu0 %v68
    %708 = vmatpush1.msra.mxu0 %v67
    %709 = vmatprep.subr.mxu0 %v64
    %710 = vmatpush1.msra.mxu0 %v63
    %711 = vmatprep.subr.mxu0 %v60
    %712 = vmatpush1.msra.mxu0 %v59
    %713 = vmatprep.subr.mxu0 %v56
    %714 = vmatpush1.msra.mxu0 %v55
    %715 = vmatprep.subr.mxu0 %v52
    %716 = vmatpush1.msra.mxu0 %v51
    %717 = vmatprep.subr.mxu0 %v48
    %718 = vmatpush1.msra.mxu0 %v47
    %719 = vmatprep.subr.mxu0 %v44
    %720 = vmatpush1.msra.mxu0 %v43
    %721 = vmatprep.subr.mxu0 %v40
    %722 = vmatpush1.msra.mxu0 %v39
    %723 = vmatprep.subr.mxu0 0.0
    %724 = vmatpush2.msra.mxu0 0.0
    %725 = vmatprep.subr.mxu0 0.0
    %726 = vmatpush2.msra.mxu0 0.0
    %727 = vmatprep.subr.mxu0 0.0
    %728 = vmatpush2.msra.mxu0 0.0
    %729 = vmatprep.subr.mxu0 0.0
    %730 = vmatpush2.msra.mxu0 0.0
    %731 = vmatprep.subr.mxu0 0.0
    %732 = vmatpush2.msra.mxu0 0.0
    %733 = vmatprep.subr.mxu0 0.0
    %734 = vmatpush2.msra.mxu0 0.0
    %735 = vmatprep.subr.mxu0 0.0
    %736 = vmatpush2.msra.mxu0 0.0
    %737 = vmatprep.subr.mxu0 0.0
    %738 = vmatpush2.msra.mxu0 0.0
    %739 = vmatprep.subr.mxu0 0.0
    %740 = vmatpush2.msra.mxu0 0.0
    %741 = vmatprep.subr.mxu0 0.0
    %742 = vmatpush2.msra.mxu0 0.0
    %743 = vmatprep.subr.mxu0 0.0
    %744 = vmatpush2.msra.mxu0 0.0
    %745 = vmatprep.subr.mxu0 0.0
    %746 = vmatpush2.msra.mxu0 0.0
    %747 = vmatprep.subr.mxu0 0.0
    %748 = vmatpush2.msra.mxu0 0.0
    %749 = vmatprep.subr.mxu0 0.0
    %750 = vmatpush2.msra.mxu0 0.0
    %751 = vmatprep.subr.mxu0 0.0
    %752 = vmatpush2.msra.mxu0 0.0
    %753 = vmatprep.subr.mxu0 0.0
    %754 = vmatpush2.msra.mxu0 0.0
    %755 = vmatprep.mubr.f32.mxu0 0.0
    %756 = vmatmul.mubr.f32.gmra.mxu0 %v673
    %v757 = vpop.f32.mrf.mxu0
    %v758 = vadd.f32 %v687, %v757
    %v759 = vpop.f32.mrf.mxu0
    %v760 = vadd.f32 %v688, %v759
    %761 = vdwg.mxu0
    %762 = vmatprep.subr.mxu0 %v102
    %763 = vmatpush1.msra.mxu0 %v101
    %764 = vmatprep.subr.mxu0 %v98
    %765 = vmatpush1.msra.mxu0 %v97
    %766 = vmatprep.subr.mxu0 %v94
    %767 = vmatpush1.msra.mxu0 %v93
    %768 = vmatprep.subr.mxu0 %v90
    %769 = vmatpush1.msra.mxu0 %v89
    %770 = vmatprep.subr.mxu0 %v86
    %771 = vmatpush1.msra.mxu0 %v85
    %772 = vmatprep.subr.mxu0 %v82
    %773 = vmatpush1.msra.mxu0 %v81
    %774 = vmatprep.subr.mxu0 %v78
    %775 = vmatpush1.msra.mxu0 %v77
    %776 = vmatprep.subr.mxu0 %v74
    %777 = vmatpush1.msra.mxu0 %v73
    %778 = vmatprep.subr.mxu0 %v70
    %779 = vmatpush1.msra.mxu0 %v69
    %780 = vmatprep.subr.mxu0 %v66
    %781 = vmatpush1.msra.mxu0 %v65
    %782 = vmatprep.subr.mxu0 %v62
    %783 = vmatpush1.msra.mxu0 %v61
    %784 = vmatprep.subr.mxu0 %v58
    %785 = vmatpush1.msra.mxu0 %v57
    %786 = vmatprep.subr.mxu0 %v54
    %787 = vmatpush1.msra.mxu0 %v53
    %788 = vmatprep.subr.mxu0 %v50
    %789 = vmatpush1.msra.mxu0 %v49
    %790 = vmatprep.subr.mxu0 %v46
    %791 = vmatpush1.msra.mxu0 %v45
    %792 = vmatprep.subr.mxu0 %v42
    %793 = vmatpush1.msra.mxu0 %v41
    %794 = vmatprep.subr.mxu0 0.0
    %795 = vmatpush2.msra.mxu0 0.0
    %796 = vmatprep.subr.mxu0 0.0
    %797 = vmatpush2.msra.mxu0 0.0
    %798 = vmatprep.subr.mxu0 0.0
    %799 = vmatpush2.msra.mxu0 0.0
    %800 = vmatprep.subr.mxu0 0.0
    %801 = vmatpush2.msra.mxu0 0.0
    %802 = vmatprep.subr.mxu0 0.0
    %803 = vmatpush2.msra.mxu0 0.0
    %804 = vmatprep.subr.mxu0 0.0
    %805 = vmatpush2.msra.mxu0 0.0
    %806 = vmatprep.subr.mxu0 0.0
    %807 = vmatpush2.msra.mxu0 0.0
    %808 = vmatprep.subr.mxu0 0.0
    %809 = vmatpush2.msra.mxu0 0.0
    %810 = vmatprep.subr.mxu0 0.0
    %811 = vmatpush2.msra.mxu0 0.0
    %812 = vmatprep.subr.mxu0 0.0
    %813 = vmatpush2.msra.mxu0 0.0
    %814 = vmatprep.subr.mxu0 0.0
    %815 = vmatpush2.msra.mxu0 0.0
    %816 = vmatprep.subr.mxu0 0.0
    %817 = vmatpush2.msra.mxu0 0.0
    %818 = vmatprep.subr.mxu0 0.0
    %819 = vmatpush2.msra.mxu0 0.0
    %820 = vmatprep.subr.mxu0 0.0
    %821 = vmatpush2.msra.mxu0 0.0
    %822 = vmatprep.subr.mxu0 0.0
    %823 = vmatpush2.msra.mxu0 0.0
    %824 = vmatprep.subr.mxu0 0.0
    %825 = vmatpush2.msra.mxu0 0.0
    %826 = vmatprep.mubr.f32.mxu0 0.0
    %827 = vmatmul.mubr.f32.gmra.mxu0 %v673
    %v828 = vpop.f32.mrf.mxu0
    %v829 = vadd.f32 %v689, %v828
    %v830 = vpop.f32.mrf.mxu0
    %v831 = vadd.f32 %v690, %v830
    %832 = vdwg.mxu0
    %v833 = vmul.f32 %v758, 0.5
    %v834 = vtanh.pop %v833
    %v835 = vmul.f32 %v834, 0.5
    %v836 = vadd.f32 %v835, 0.5
    %v837 = vmul.f32 %v760, 0.5
    %v838 = vtanh.pop %v837
    %v839 = vmul.f32 %v838, 0.5
    %v840 = vadd.f32 %v839, 0.5
    %v841 = vtanh.pop %v829
    %v842 = vmul.f32 %v831, 0.5
    %v843 = vtanh.pop %v842
    %v844 = vmul.f32 %v843, 0.5
    %v845 = vadd.f32 %v844, 0.5
    %v846 = vmul.f32 %v840, %v671
    %v847 = vmul.f32 %v836, %v841
    %v848 = vadd.f32 %v846, %v847
    %v849 = vtanh.pop %v848
    %v850 = vmul.f32 %v845, %v849
    %s851 = scalar_lea.vmem [#allocation2], 6
    %852 = vst [vmem:[%s851] sm:$0x3] %v850
    %s853 = scalar_lea.vmem %s0, 8
    %v854 = vld [vmem:[%s853] sm:$0x3]
    %856 = vset.pattern.permute.xlu0 0
    %857 = vperm.xlu0 %856, %v854
    %v858 = vpop.permute.xlu0 %857
    %v860 = vmul.f32 %v858, %v115
    %v861 = vmul.f32 %v858, %v119
    %v862 = vmul.f32 %v858, %v123
    %v863 = vmul.f32 %v858, %v127
    %v864 = vadd.f32 %v140, %v860
    %v865 = vadd.f32 %v144, %v861
    %v866 = vadd.f32 %v148, %v862
    %v867 = vadd.f32 %v152, %v863
    %868 = vmatprep.subr.mxu0 %v100
    %869 = vmatpush1.msra.mxu0 %v99
    %870 = vmatprep.subr.mxu0 %v96
    %871 = vmatpush1.msra.mxu0 %v95
    %872 = vmatprep.subr.mxu0 %v92
    %873 = vmatpush1.msra.mxu0 %v91
    %874 = vmatprep.subr.mxu0 %v88
    %875 = vmatpush1.msra.mxu0 %v87
    %876 = vmatprep.subr.mxu0 %v84
    %877 = vmatpush1.msra.mxu0 %v83
    %878 = vmatprep.subr.mxu0 %v80
    %879 = vmatpush1.msra.mxu0 %v79
    %880 = vmatprep.subr.mxu0 %v76
    %881 = vmatpush1.msra.mxu0 %v75
    %882 = vmatprep.subr.mxu0 %v72
    %883 = vmatpush1.msra.mxu0 %v71
    %884 = vmatprep.subr.mxu0 %v68
    %885 = vmatpush1.msra.mxu0 %v67
    %886 = vmatprep.subr.mxu0 %v64
    %887 = vmatpush1.msra.mxu0 %v63
    %888 = vmatprep.subr.mxu0 %v60
    %889 = vmatpush1.msra.mxu0 %v59
    %890 = vmatprep.subr.mxu0 %v56
    %891 = vmatpush1.msra.mxu0 %v55
    %892 = vmatprep.subr.mxu0 %v52
    %893 = vmatpush1.msra.mxu0 %v51
    %894 = vmatprep.subr.mxu0 %v48
    %895 = vmatpush1.msra.mxu0 %v47
    %896 = vmatprep.subr.mxu0 %v44
    %897 = vmatpush1.msra.mxu0 %v43
    %898 = vmatprep.subr.mxu0 %v40
    %899 = vmatpush1.msra.mxu0 %v39
    %900 = vmatprep.subr.mxu0 0.0
    %901 = vmatpush2.msra.mxu0 0.0
    %902 = vmatprep.subr.mxu0 0.0
    %903 = vmatpush2.msra.mxu0 0.0
    %904 = vmatprep.subr.mxu0 0.0
    %905 = vmatpush2.msra.mxu0 0.0
    %906 = vmatprep.subr.mxu0 0.0
    %907 = vmatpush2.msra.mxu0 0.0
    %908 = vmatprep.subr.mxu0 0.0
    %909 = vmatpush2.msra.mxu0 0.0
    %910 = vmatprep.subr.mxu0 0.0
    %911 = vmatpush2.msra.mxu0 0.0
    %912 = vmatprep.subr.mxu0 0.0
    %913 = vmatpush2.msra.mxu0 0.0
    %914 = vmatprep.subr.mxu0 0.0
    %915 = vmatpush2.msra.mxu0 0.0
    %916 = vmatprep.subr.mxu0 0.0
    %917 = vmatpush2.msra.mxu0 0.0
    %918 = vmatprep.subr.mxu0 0.0
    %919 = vmatpush2.msra.mxu0 0.0
    %920 = vmatprep.subr.mxu0 0.0
    %921 = vmatpush2.msra.mxu0 0.0
    %922 = vmatprep.subr.mxu0 0.0
    %923 = vmatpush2.msra.mxu0 0.0
    %924 = vmatprep.subr.mxu0 0.0
    %925 = vmatpush2.msra.mxu0 0.0
    %926 = vmatprep.subr.mxu0 0.0
    %927 = vmatpush2.msra.mxu0 0.0
    %928 = vmatprep.subr.mxu0 0.0
    %929 = vmatpush2.msra.mxu0 0.0
    %930 = vmatprep.subr.mxu0 0.0
    %931 = vmatpush2.msra.mxu0 0.0
    %932 = vmatprep.mubr.f32.mxu0 0.0
    %933 = vmatmul.mubr.f32.gmra.mxu0 %v850
    %v934 = vpop.f32.mrf.mxu0
    %v935 = vadd.f32 %v864, %v934
    %v936 = vpop.f32.mrf.mxu0
    %v937 = vadd.f32 %v865, %v936
    %938 = vdwg.mxu0
    %939 = vmatprep.subr.mxu0 %v102
    %940 = vmatpush1.msra.mxu0 %v101
    %941 = vmatprep.subr.mxu0 %v98
    %942 = vmatpush1.msra.mxu0 %v97
    %943 = vmatprep.subr.mxu0 %v94
    %944 = vmatpush1.msra.mxu0 %v93
    %945 = vmatprep.subr.mxu0 %v90
    %946 = vmatpush1.msra.mxu0 %v89
    %947 = vmatprep.subr.mxu0 %v86
    %948 = vmatpush1.msra.mxu0 %v85
    %949 = vmatprep.subr.mxu0 %v82
    %950 = vmatpush1.msra.mxu0 %v81
    %951 = vmatprep.subr.mxu0 %v78
    %952 = vmatpush1.msra.mxu0 %v77
    %953 = vmatprep.subr.mxu0 %v74
    %954 = vmatpush1.msra.mxu0 %v73
    %955 = vmatprep.subr.mxu0 %v70
    %956 = vmatpush1.msra.mxu0 %v69
    %957 = vmatprep.subr.mxu0 %v66
    %958 = vmatpush1.msra.mxu0 %v65
    %959 = vmatprep.subr.mxu0 %v62
    %960 = vmatpush1.msra.mxu0 %v61
    %961 = vmatprep.subr.mxu0 %v58
    %962 = vmatpush1.msra.mxu0 %v57
    %963 = vmatprep.subr.mxu0 %v54
    %964 = vmatpush1.msra.mxu0 %v53
    %965 = vmatprep.subr.mxu0 %v50
    %966 = vmatpush1.msra.mxu0 %v49
    %967 = vmatprep.subr.mxu0 %v46
    %968 = vmatpush1.msra.mxu0 %v45
    %969 = vmatprep.subr.mxu0 %v42
    %970 = vmatpush1.msra.mxu0 %v41
    %971 = vmatprep.subr.mxu0 0.0
    %972 = vmatpush2.msra.mxu0 0.0
    %973 = vmatprep.subr.mxu0 0.0
    %974 = vmatpush2.msra.mxu0 0.0
    %975 = vmatprep.subr.mxu0 0.0
    %976 = vmatpush2.msra.mxu0 0.0
    %977 = vmatprep.subr.mxu0 0.0
    %978 = vmatpush2.msra.mxu0 0.0
    %979 = vmatprep.subr.mxu0 0.0
    %980 = vmatpush2.msra.mxu0 0.0
    %981 = vmatprep.subr.mxu0 0.0
    %982 = vmatpush2.msra.mxu0 0.0
    %983 = vmatprep.subr.mxu0 0.0
    %984 = vmatpush2.msra.mxu0 0.0
    %985 = vmatprep.subr.mxu0 0.0
    %986 = vmatpush2.msra.mxu0 0.0
    %987 = vmatprep.subr.mxu0 0.0
    %988 = vmatpush2.msra.mxu0 0.0
    %989 = vmatprep.subr.mxu0 0.0
    %990 = vmatpush2.msra.mxu0 0.0
    %991 = vmatprep.subr.mxu0 0.0
    %992 = vmatpush2.msra.mxu0 0.0
    %993 = vmatprep.subr.mxu0 0.0
    %994 = vmatpush2.msra.mxu0 0.0
    %995 = vmatprep.subr.mxu0 0.0
    %996 = vmatpush2.msra.mxu0 0.0
    %997 = vmatprep.subr.mxu0 0.0
    %998 = vmatpush2.msra.mxu0 0.0
    %999 = vmatprep.subr.mxu0 0.0
    %1000 = vmatpush2.msra.mxu0 0.0
    %1001 = vmatprep.subr.mxu0 0.0
    %1002 = vmatpush2.msra.mxu0 0.0
    %1003 = vmatprep.mubr.f32.mxu0 0.0
    %1004 = vmatmul.mubr.f32.gmra.mxu0 %v850
    %v1005 = vpop.f32.mrf.mxu0
    %v1006 = vadd.f32 %v866, %v1005
    %v1007 = vpop.f32.mrf.mxu0
    %v1008 = vadd.f32 %v867, %v1007
    %1009 = vdwg.mxu0
    %v1010 = vmul.f32 %v935, 0.5
    %v1011 = vtanh.pop %v1010
    %v1012 = vmul.f32 %v1011, 0.5
    %v1013 = vadd.f32 %v1012, 0.5
    %v1014 = vmul.f32 %v937, 0.5
    %v1015 = vtanh.pop %v1014
    %v1016 = vmul.f32 %v1015, 0.5
    %v1017 = vadd.f32 %v1016, 0.5
    %v1018 = vtanh.pop %v1006
    %v1019 = vmul.f32 %v1008, 0.5
    %v1020 = vtanh.pop %v1019
    %v1021 = vmul.f32 %v1020, 0.5
    %v1022 = vadd.f32 %v1021, 0.5
    %v1023 = vmul.f32 %v1017, %v848
    %v1024 = vmul.f32 %v1013, %v1018
    %v1025 = vadd.f32 %v1023, %v1024
    %v1026 = vtanh.pop %v1025
    %v1027 = vmul.f32 %v1022, %v1026
    %s1028 = scalar_lea.vmem [#allocation2], 8
    %1029 = vst [vmem:[%s1028] sm:$0x3] %v1027
    %s1030 = scalar_lea.vmem %s0, 10
    %v1031 = vld [vmem:[%s1030] sm:$0x3]
    %1033 = vset.pattern.permute.xlu0 0
    %1034 = vperm.xlu0 %1033, %v1031
    %v1035 = vpop.permute.xlu0 %1034
    %v1037 = vmul.f32 %v1035, %v115
    %v1038 = vmul.f32 %v1035, %v119
    %v1039 = vmul.f32 %v1035, %v123
    %v1040 = vmul.f32 %v1035, %v127
    %v1041 = vadd.f32 %v140, %v1037
    %v1042 = vadd.f32 %v144, %v1038
    %v1043 = vadd.f32 %v148, %v1039
    %v1044 = vadd.f32 %v152, %v1040
    %1045 = vmatprep.subr.mxu0 %v100
    %1046 = vmatpush1.msra.mxu0 %v99
    %1047 = vmatprep.subr.mxu0 %v96
    %1048 = vmatpush1.msra.mxu0 %v95
    %1049 = vmatprep.subr.mxu0 %v92
    %1050 = vmatpush1.msra.mxu0 %v91
    %1051 = vmatprep.subr.mxu0 %v88
    %1052 = vmatpush1.msra.mxu0 %v87
    %1053 = vmatprep.subr.mxu0 %v84
    %1054 = vmatpush1.msra.mxu0 %v83
    %1055 = vmatprep.subr.mxu0 %v80
    %1056 = vmatpush1.msra.mxu0 %v79
    %1057 = vmatprep.subr.mxu0 %v76
    %1058 = vmatpush1.msra.mxu0 %v75
    %1059 = vmatprep.subr.mxu0 %v72
    %1060 = vmatpush1.msra.mxu0 %v71
    %1061 = vmatprep.subr.mxu0 %v68
    %1062 = vmatpush1.msra.mxu0 %v67
    %1063 = vmatprep.subr.mxu0 %v64
    %1064 = vmatpush1.msra.mxu0 %v63
    %1065 = vmatprep.subr.mxu0 %v60
    %1066 = vmatpush1.msra.mxu0 %v59
    %1067 = vmatprep.subr.mxu0 %v56
    %1068 = vmatpush1.msra.mxu0 %v55
    %1069 = vmatprep.subr.mxu0 %v52
    %1070 = vmatpush1.msra.mxu0 %v51
    %1071 = vmatprep.subr.mxu0 %v48
    %1072 = vmatpush1.msra.mxu0 %v47
    %1073 = vmatprep.subr.mxu0 %v44
    %1074 = vmatpush1.msra.mxu0 %v43
    %1075 = vmatprep.subr.mxu0 %v40
    %1076 = vmatpush1.msra.mxu0 %v39
    %1077 = vmatprep.subr.mxu0 0.0
    %1078 = vmatpush2.msra.mxu0 0.0
    %1079 = vmatprep.subr.mxu0 0.0
    %1080 = vmatpush2.msra.mxu0 0.0
    %1081 = vmatprep.subr.mxu0 0.0
    %1082 = vmatpush2.msra.mxu0 0.0
    %1083 = vmatprep.subr.mxu0 0.0
    %1084 = vmatpush2.msra.mxu0 0.0
    %1085 = vmatprep.subr.mxu0 0.0
    %1086 = vmatpush2.msra.mxu0 0.0
    %1087 = vmatprep.subr.mxu0 0.0
    %1088 = vmatpush2.msra.mxu0 0.0
    %1089 = vmatprep.subr.mxu0 0.0
    %1090 = vmatpush2.msra.mxu0 0.0
    %1091 = vmatprep.subr.mxu0 0.0
    %1092 = vmatpush2.msra.mxu0 0.0
    %1093 = vmatprep.subr.mxu0 0.0
    %1094 = vmatpush2.msra.mxu0 0.0
    %1095 = vmatprep.subr.mxu0 0.0
    %1096 = vmatpush2.msra.mxu0 0.0
    %1097 = vmatprep.subr.mxu0 0.0
    %1098 = vmatpush2.msra.mxu0 0.0
    %1099 = vmatprep.subr.mxu0 0.0
    %1100 = vmatpush2.msra.mxu0 0.0
    %1101 = vmatprep.subr.mxu0 0.0
    %1102 = vmatpush2.msra.mxu0 0.0
    %1103 = vmatprep.subr.mxu0 0.0
    %1104 = vmatpush2.msra.mxu0 0.0
    %1105 = vmatprep.subr.mxu0 0.0
    %1106 = vmatpush2.msra.mxu0 0.0
    %1107 = vmatprep.subr.mxu0 0.0
    %1108 = vmatpush2.msra.mxu0 0.0
    %1109 = vmatprep.mubr.f32.mxu0 0.0
    %1110 = vmatmul.mubr.f32.gmra.mxu0 %v1027
    %v1111 = vpop.f32.mrf.mxu0
    %v1112 = vadd.f32 %v1041, %v1111
    %v1113 = vpop.f32.mrf.mxu0
    %v1114 = vadd.f32 %v1042, %v1113
    %1115 = vdwg.mxu0
    %1116 = vmatprep.subr.mxu0 %v102
    %1117 = vmatpush1.msra.mxu0 %v101
    %1118 = vmatprep.subr.mxu0 %v98
    %1119 = vmatpush1.msra.mxu0 %v97
    %1120 = vmatprep.subr.mxu0 %v94
    %1121 = vmatpush1.msra.mxu0 %v93
    %1122 = vmatprep.subr.mxu0 %v90
    %1123 = vmatpush1.msra.mxu0 %v89
    %1124 = vmatprep.subr.mxu0 %v86
    %1125 = vmatpush1.msra.mxu0 %v85
    %1126 = vmatprep.subr.mxu0 %v82
    %1127 = vmatpush1.msra.mxu0 %v81
    %1128 = vmatprep.subr.mxu0 %v78
    %1129 = vmatpush1.msra.mxu0 %v77
    %1130 = vmatprep.subr.mxu0 %v74
    %1131 = vmatpush1.msra.mxu0 %v73
    %1132 = vmatprep.subr.mxu0 %v70
    %1133 = vmatpush1.msra.mxu0 %v69
    %1134 = vmatprep.subr.mxu0 %v66
    %1135 = vmatpush1.msra.mxu0 %v65
    %1136 = vmatprep.subr.mxu0 %v62
    %1137 = vmatpush1.msra.mxu0 %v61
    %1138 = vmatprep.subr.mxu0 %v58
    %1139 = vmatpush1.msra.mxu0 %v57
    %1140 = vmatprep.subr.mxu0 %v54
    %1141 = vmatpush1.msra.mxu0 %v53
    %1142 = vmatprep.subr.mxu0 %v50
    %1143 = vmatpush1.msra.mxu0 %v49
    %1144 = vmatprep.subr.mxu0 %v46
    %1145 = vmatpush1.msra.mxu0 %v45
    %1146 = vmatprep.subr.mxu0 %v42
    %1147 = vmatpush1.msra.mxu0 %v41
    %1148 = vmatprep.subr.mxu0 0.0
    %1149 = vmatpush2.msra.mxu0 0.0
    %1150 = vmatprep.subr.mxu0 0.0
    %1151 = vmatpush2.msra.mxu0 0.0
    %1152 = vmatprep.subr.mxu0 0.0
    %1153 = vmatpush2.msra.mxu0 0.0
    %1154 = vmatprep.subr.mxu0 0.0
    %1155 = vmatpush2.msra.mxu0 0.0
    %1156 = vmatprep.subr.mxu0 0.0
    %1157 = vmatpush2.msra.mxu0 0.0
    %1158 = vmatprep.subr.mxu0 0.0
    %1159 = vmatpush2.msra.mxu0 0.0
    %1160 = vmatprep.subr.mxu0 0.0
    %1161 = vmatpush2.msra.mxu0 0.0
    %1162 = vmatprep.subr.mxu0 0.0
    %1163 = vmatpush2.msra.mxu0 0.0
    %1164 = vmatprep.subr.mxu0 0.0
    %1165 = vmatpush2.msra.mxu0 0.0
    %1166 = vmatprep.subr.mxu0 0.0
    %1167 = vmatpush2.msra.mxu0 0.0
    %1168 = vmatprep.subr.mxu0 0.0
    %1169 = vmatpush2.msra.mxu0 0.0
    %1170 = vmatprep.subr.mxu0 0.0
    %1171 = vmatpush2.msra.mxu0 0.0
    %1172 = vmatprep.subr.mxu0 0.0
    %1173 = vmatpush2.msra.mxu0 0.0
    %1174 = vmatprep.subr.mxu0 0.0
    %1175 = vmatpush2.msra.mxu0 0.0
    %1176 = vmatprep.subr.mxu0 0.0
    %1177 = vmatpush2.msra.mxu0 0.0
    %1178 = vmatprep.subr.mxu0 0.0
    %1179 = vmatpush2.msra.mxu0 0.0
    %1180 = vmatprep.mubr.f32.mxu0 0.0
    %1181 = vmatmul.mubr.f32.gmra.mxu0 %v1027
    %v1182 = vpop.f32.mrf.mxu0
    %v1183 = vadd.f32 %v1043, %v1182
    %v1184 = vpop.f32.mrf.mxu0
    %v1185 = vadd.f32 %v1044, %v1184
    %1186 = vdwg.mxu0
    %v1187 = vmul.f32 %v1112, 0.5
    %v1188 = vtanh.pop %v1187
    %v1189 = vmul.f32 %v1188, 0.5
    %v1190 = vadd.f32 %v1189, 0.5
    %v1191 = vmul.f32 %v1114, 0.5
    %v1192 = vtanh.pop %v1191
    %v1193 = vmul.f32 %v1192, 0.5
    %v1194 = vadd.f32 %v1193, 0.5
    %v1195 = vtanh.pop %v1183
    %v1196 = vmul.f32 %v1185, 0.5
    %v1197 = vtanh.pop %v1196
    %v1198 = vmul.f32 %v1197, 0.5
    %v1199 = vadd.f32 %v1198, 0.5
    %v1200 = vmul.f32 %v1194, %v1025
    %v1201 = vmul.f32 %v1190, %v1195
    %v1202 = vadd.f32 %v1200, %v1201
    %v1203 = vtanh.pop %v1202
    %v1204 = vmul.f32 %v1199, %v1203
    %s1205 = scalar_lea.vmem [#allocation2], 10
    %1206 = vst [vmem:[%s1205] sm:$0x3] %v1204
    %s1207 = scalar_lea.vmem %s0, 12
    %v1208 = vld [vmem:[%s1207] sm:$0x3]
    %1210 = vset.pattern.permute.xlu0 0
    %1211 = vperm.xlu0 %1210, %v1208
    %v1212 = vpop.permute.xlu0 %1211
    %v1214 = vmul.f32 %v1212, %v115
    %v1215 = vmul.f32 %v1212, %v119
    %v1216 = vmul.f32 %v1212, %v123
    %v1217 = vmul.f32 %v1212, %v127
    %v1218 = vadd.f32 %v140, %v1214
    %v1219 = vadd.f32 %v144, %v1215
    %v1220 = vadd.f32 %v148, %v1216
    %v1221 = vadd.f32 %v152, %v1217
    %1222 = vmatprep.subr.mxu0 %v100
    %1223 = vmatpush1.msra.mxu0 %v99
    %1224 = vmatprep.subr.mxu0 %v96
    %1225 = vmatpush1.msra.mxu0 %v95
    %1226 = vmatprep.subr.mxu0 %v92
    %1227 = vmatpush1.msra.mxu0 %v91
    %1228 = vmatprep.subr.mxu0 %v88
    %1229 = vmatpush1.msra.mxu0 %v87
    %1230 = vmatprep.subr.mxu0 %v84
    %1231 = vmatpush1.msra.mxu0 %v83
    %1232 = vmatprep.subr.mxu0 %v80
    %1233 = vmatpush1.msra.mxu0 %v79
    %1234 = vmatprep.subr.mxu0 %v76
    %1235 = vmatpush1.msra.mxu0 %v75
    %1236 = vmatprep.subr.mxu0 %v72
    %1237 = vmatpush1.msra.mxu0 %v71
    %1238 = vmatprep.subr.mxu0 %v68
    %1239 = vmatpush1.msra.mxu0 %v67
    %1240 = vmatprep.subr.mxu0 %v64
    %1241 = vmatpush1.msra.mxu0 %v63
    %1242 = vmatprep.subr.mxu0 %v60
    %1243 = vmatpush1.msra.mxu0 %v59
    %1244 = vmatprep.subr.mxu0 %v56
    %1245 = vmatpush1.msra.mxu0 %v55
    %1246 = vmatprep.subr.mxu0 %v52
    %1247 = vmatpush1.msra.mxu0 %v51
    %1248 = vmatprep.subr.mxu0 %v48
    %1249 = vmatpush1.msra.mxu0 %v47
    %1250 = vmatprep.subr.mxu0 %v44
    %1251 = vmatpush1.msra.mxu0 %v43
    %1252 = vmatprep.subr.mxu0 %v40
    %1253 = vmatpush1.msra.mxu0 %v39
    %1254 = vmatprep.subr.mxu0 0.0
    %1255 = vmatpush2.msra.mxu0 0.0
    %1256 = vmatprep.subr.mxu0 0.0
    %1257 = vmatpush2.msra.mxu0 0.0
    %1258 = vmatprep.subr.mxu0 0.0
    %1259 = vmatpush2.msra.mxu0 0.0
    %1260 = vmatprep.subr.mxu0 0.0
    %1261 = vmatpush2.msra.mxu0 0.0
    %1262 = vmatprep.subr.mxu0 0.0
    %1263 = vmatpush2.msra.mxu0 0.0
    %1264 = vmatprep.subr.mxu0 0.0
    %1265 = vmatpush2.msra.mxu0 0.0
    %1266 = vmatprep.subr.mxu0 0.0
    %1267 = vmatpush2.msra.mxu0 0.0
    %1268 = vmatprep.subr.mxu0 0.0
    %1269 = vmatpush2.msra.mxu0 0.0
    %1270 = vmatprep.subr.mxu0 0.0
    %1271 = vmatpush2.msra.mxu0 0.0
    %1272 = vmatprep.subr.mxu0 0.0
    %1273 = vmatpush2.msra.mxu0 0.0
    %1274 = vmatprep.subr.mxu0 0.0
    %1275 = vmatpush2.msra.mxu0 0.0
    %1276 = vmatprep.subr.mxu0 0.0
    %1277 = vmatpush2.msra.mxu0 0.0
    %1278 = vmatprep.subr.mxu0 0.0
    %1279 = vmatpush2.msra.mxu0 0.0
    %1280 = vmatprep.subr.mxu0 0.0
    %1281 = vmatpush2.msra.mxu0 0.0
    %1282 = vmatprep.subr.mxu0 0.0
    %1283 = vmatpush2.msra.mxu0 0.0
    %1284 = vmatprep.subr.mxu0 0.0
    %1285 = vmatpush2.msra.mxu0 0.0
    %1286 = vmatprep.mubr.f32.mxu0 0.0
    %1287 = vmatmul.mubr.f32.gmra.mxu0 %v1204
    %v1288 = vpop.f32.mrf.mxu0
    %v1289 = vadd.f32 %v1218, %v1288
    %v1290 = vpop.f32.mrf.mxu0
    %v1291 = vadd.f32 %v1219, %v1290
    %1292 = vdwg.mxu0
    %1293 = vmatprep.subr.mxu0 %v102
    %1294 = vmatpush1.msra.mxu0 %v101
    %1295 = vmatprep.subr.mxu0 %v98
    %1296 = vmatpush1.msra.mxu0 %v97
    %1297 = vmatprep.subr.mxu0 %v94
    %1298 = vmatpush1.msra.mxu0 %v93
    %1299 = vmatprep.subr.mxu0 %v90
    %1300 = vmatpush1.msra.mxu0 %v89
    %1301 = vmatprep.subr.mxu0 %v86
    %1302 = vmatpush1.msra.mxu0 %v85
    %1303 = vmatprep.subr.mxu0 %v82
    %1304 = vmatpush1.msra.mxu0 %v81
    %1305 = vmatprep.subr.mxu0 %v78
    %1306 = vmatpush1.msra.mxu0 %v77
    %1307 = vmatprep.subr.mxu0 %v74
    %1308 = vmatpush1.msra.mxu0 %v73
    %1309 = vmatprep.subr.mxu0 %v70
    %1310 = vmatpush1.msra.mxu0 %v69
    %1311 = vmatprep.subr.mxu0 %v66
    %1312 = vmatpush1.msra.mxu0 %v65
    %1313 = vmatprep.subr.mxu0 %v62
    %1314 = vmatpush1.msra.mxu0 %v61
    %1315 = vmatprep.subr.mxu0 %v58
    %1316 = vmatpush1.msra.mxu0 %v57
    %1317 = vmatprep.subr.mxu0 %v54
    %1318 = vmatpush1.msra.mxu0 %v53
    %1319 = vmatprep.subr.mxu0 %v50
    %1320 = vmatpush1.msra.mxu0 %v49
    %1321 = vmatprep.subr.mxu0 %v46
    %1322 = vmatpush1.msra.mxu0 %v45
    %1323 = vmatprep.subr.mxu0 %v42
    %1324 = vmatpush1.msra.mxu0 %v41
    %1325 = vmatprep.subr.mxu0 0.0
    %1326 = vmatpush2.msra.mxu0 0.0
    %1327 = vmatprep.subr.mxu0 0.0
    %1328 = vmatpush2.msra.mxu0 0.0
    %1329 = vmatprep.subr.mxu0 0.0
    %1330 = vmatpush2.msra.mxu0 0.0
    %1331 = vmatprep.subr.mxu0 0.0
    %1332 = vmatpush2.msra.mxu0 0.0
    %1333 = vmatprep.subr.mxu0 0.0
    %1334 = vmatpush2.msra.mxu0 0.0
    %1335 = vmatprep.subr.mxu0 0.0
    %1336 = vmatpush2.msra.mxu0 0.0
    %1337 = vmatprep.subr.mxu0 0.0
    %1338 = vmatpush2.msra.mxu0 0.0
    %1339 = vmatprep.subr.mxu0 0.0
    %1340 = vmatpush2.msra.mxu0 0.0
    %1341 = vmatprep.subr.mxu0 0.0
    %1342 = vmatpush2.msra.mxu0 0.0
    %1343 = vmatprep.subr.mxu0 0.0
    %1344 = vmatpush2.msra.mxu0 0.0
    %1345 = vmatprep.subr.mxu0 0.0
    %1346 = vmatpush2.msra.mxu0 0.0
    %1347 = vmatprep.subr.mxu0 0.0
    %1348 = vmatpush2.msra.mxu0 0.0
    %1349 = vmatprep.subr.mxu0 0.0
    %1350 = vmatpush2.msra.mxu0 0.0
    %1351 = vmatprep.subr.mxu0 0.0
    %1352 = vmatpush2.msra.mxu0 0.0
    %1353 = vmatprep.subr.mxu0 0.0
    %1354 = vmatpush2.msra.mxu0 0.0
    %1355 = vmatprep.subr.mxu0 0.0
    %1356 = vmatpush2.msra.mxu0 0.0
    %1357 = vmatprep.mubr.f32.mxu0 0.0
    %1358 = vmatmul.mubr.f32.gmra.mxu0 %v1204
    %v1359 = vpop.f32.mrf.mxu0
    %v1360 = vadd.f32 %v1220, %v1359
    %v1361 = vpop.f32.mrf.mxu0
    %v1362 = vadd.f32 %v1221, %v1361
    %1363 = vdwg.mxu0
    %v1364 = vmul.f32 %v1289, 0.5
    %v1365 = vtanh.pop %v1364
    %v1366 = vmul.f32 %v1365, 0.5
    %v1367 = vadd.f32 %v1366, 0.5
    %v1368 = vmul.f32 %v1291, 0.5
    %v1369 = vtanh.pop %v1368
    %v1370 = vmul.f32 %v1369, 0.5
    %v1371 = vadd.f32 %v1370, 0.5
    %v1372 = vtanh.pop %v1360
    %v1373 = vmul.f32 %v1362, 0.5
    %v1374 = vtanh.pop %v1373
    %v1375 = vmul.f32 %v1374, 0.5
    %v1376 = vadd.f32 %v1375, 0.5
    %v1377 = vmul.f32 %v1371, %v1202
    %v1378 = vmul.f32 %v1367, %v1372
    %v1379 = vadd.f32 %v1377, %v1378
    %v1380 = vtanh.pop %v1379
    %v1381 = vmul.f32 %v1376, %v1380
    %s1382 = scalar_lea.vmem [#allocation2], 12
    %1383 = vst [vmem:[%s1382] sm:$0x3] %v1381
    %s1384 = scalar_lea.vmem %s0, 14
    %v1385 = vld [vmem:[%s1384] sm:$0x3]
    %1387 = vset.pattern.permute.xlu0 0
    %1388 = vperm.xlu0 %1387, %v1385
    %v1389 = vpop.permute.xlu0 %1388
    %v1391 = vmul.f32 %v1389, %v115
    %v1392 = vmul.f32 %v1389, %v119
    %v1393 = vmul.f32 %v1389, %v123
    %v1394 = vmul.f32 %v1389, %v127
    %v1395 = vadd.f32 %v140, %v1391
    %v1396 = vadd.f32 %v144, %v1392
    %v1397 = vadd.f32 %v148, %v1393
    %v1398 = vadd.f32 %v152, %v1394
    %1399 = vmatprep.subr.mxu0 %v100
    %1400 = vmatpush1.msra.mxu0 %v99
    %1401 = vmatprep.subr.mxu0 %v96
    %1402 = vmatpush1.msra.mxu0 %v95
    %1403 = vmatprep.subr.mxu0 %v92
    %1404 = vmatpush1.msra.mxu0 %v91
    %1405 = vmatprep.subr.mxu0 %v88
    %1406 = vmatpush1.msra.mxu0 %v87
    %1407 = vmatprep.subr.mxu0 %v84
    %1408 = vmatpush1.msra.mxu0 %v83
    %1409 = vmatprep.subr.mxu0 %v80
    %1410 = vmatpush1.msra.mxu0 %v79
    %1411 = vmatprep.subr.mxu0 %v76
    %1412 = vmatpush1.msra.mxu0 %v75
    %1413 = vmatprep.subr.mxu0 %v72
    %1414 = vmatpush1.msra.mxu0 %v71
    %1415 = vmatprep.subr.mxu0 %v68
    %1416 = vmatpush1.msra.mxu0 %v67
    %1417 = vmatprep.subr.mxu0 %v64
    %1418 = vmatpush1.msra.mxu0 %v63
    %1419 = vmatprep.subr.mxu0 %v60
    %1420 = vmatpush1.msra.mxu0 %v59
    %1421 = vmatprep.subr.mxu0 %v56
    %1422 = vmatpush1.msra.mxu0 %v55
    %1423 = vmatprep.subr.mxu0 %v52
    %1424 = vmatpush1.msra.mxu0 %v51
    %1425 = vmatprep.subr.mxu0 %v48
    %1426 = vmatpush1.msra.mxu0 %v47
    %1427 = vmatprep.subr.mxu0 %v44
    %1428 = vmatpush1.msra.mxu0 %v43
    %1429 = vmatprep.subr.mxu0 %v40
    %1430 = vmatpush1.msra.mxu0 %v39
    %1431 = vmatprep.subr.mxu0 0.0
    %1432 = vmatpush2.msra.mxu0 0.0
    %1433 = vmatprep.subr.mxu0 0.0
    %1434 = vmatpush2.msra.mxu0 0.0
    %1435 = vmatprep.subr.mxu0 0.0
    %1436 = vmatpush2.msra.mxu0 0.0
    %1437 = vmatprep.subr.mxu0 0.0
    %1438 = vmatpush2.msra.mxu0 0.0
    %1439 = vmatprep.subr.mxu0 0.0
    %1440 = vmatpush2.msra.mxu0 0.0
    %1441 = vmatprep.subr.mxu0 0.0
    %1442 = vmatpush2.msra.mxu0 0.0
    %1443 = vmatprep.subr.mxu0 0.0
    %1444 = vmatpush2.msra.mxu0 0.0
    %1445 = vmatprep.subr.mxu0 0.0
    %1446 = vmatpush2.msra.mxu0 0.0
    %1447 = vmatprep.subr.mxu0 0.0
    %1448 = vmatpush2.msra.mxu0 0.0
    %1449 = vmatprep.subr.mxu0 0.0
    %1450 = vmatpush2.msra.mxu0 0.0
    %1451 = vmatprep.subr.mxu0 0.0
    %1452 = vmatpush2.msra.mxu0 0.0
    %1453 = vmatprep.subr.mxu0 0.0
    %1454 = vmatpush2.msra.mxu0 0.0
    %1455 = vmatprep.subr.mxu0 0.0
    %1456 = vmatpush2.msra.mxu0 0.0
    %1457 = vmatprep.subr.mxu0 0.0
    %1458 = vmatpush2.msra.mxu0 0.0
    %1459 = vmatprep.subr.mxu0 0.0
    %1460 = vmatpush2.msra.mxu0 0.0
    %1461 = vmatprep.subr.mxu0 0.0
    %1462 = vmatpush2.msra.mxu0 0.0
    %1463 = vmatprep.mubr.f32.mxu0 0.0
    %1464 = vmatmul.mubr.f32.gmra.mxu0 %v1381
    %v1465 = vpop.f32.mrf.mxu0
    %v1466 = vadd.f32 %v1395, %v1465
    %v1467 = vpop.f32.mrf.mxu0
    %v1468 = vadd.f32 %v1396, %v1467
    %1469 = vdwg.mxu0
    %1470 = vmatprep.subr.mxu0 %v102
    %1471 = vmatpush1.msra.mxu0 %v101
    %1472 = vmatprep.subr.mxu0 %v98
    %1473 = vmatpush1.msra.mxu0 %v97
    %1474 = vmatprep.subr.mxu0 %v94
    %1475 = vmatpush1.msra.mxu0 %v93
    %1476 = vmatprep.subr.mxu0 %v90
    %1477 = vmatpush1.msra.mxu0 %v89
    %1478 = vmatprep.subr.mxu0 %v86
    %1479 = vmatpush1.msra.mxu0 %v85
    %1480 = vmatprep.subr.mxu0 %v82
    %1481 = vmatpush1.msra.mxu0 %v81
    %1482 = vmatprep.subr.mxu0 %v78
    %1483 = vmatpush1.msra.mxu0 %v77
    %1484 = vmatprep.subr.mxu0 %v74
    %1485 = vmatpush1.msra.mxu0 %v73
    %1486 = vmatprep.subr.mxu0 %v70
    %1487 = vmatpush1.msra.mxu0 %v69
    %1488 = vmatprep.subr.mxu0 %v66
    %1489 = vmatpush1.msra.mxu0 %v65
    %1490 = vmatprep.subr.mxu0 %v62
    %1491 = vmatpush1.msra.mxu0 %v61
    %1492 = vmatprep.subr.mxu0 %v58
    %1493 = vmatpush1.msra.mxu0 %v57
    %1494 = vmatprep.subr.mxu0 %v54
    %1495 = vmatpush1.msra.mxu0 %v53
    %1496 = vmatprep.subr.mxu0 %v50
    %1497 = vmatpush1.msra.mxu0 %v49
    %1498 = vmatprep.subr.mxu0 %v46
    %1499 = vmatpush1.msra.mxu0 %v45
    %1500 = vmatprep.subr.mxu0 %v42
    %1501 = vmatpush1.msra.mxu0 %v41
    %1502 = vmatprep.subr.mxu0 0.0
    %1503 = vmatpush2.msra.mxu0 0.0
    %1504 = vmatprep.subr.mxu0 0.0
    %1505 = vmatpush2.msra.mxu0 0.0
    %1506 = vmatprep.subr.mxu0 0.0
    %1507 = vmatpush2.msra.mxu0 0.0
    %1508 = vmatprep.subr.mxu0 0.0
    %1509 = vmatpush2.msra.mxu0 0.0
    %1510 = vmatprep.subr.mxu0 0.0
    %1511 = vmatpush2.msra.mxu0 0.0
    %1512 = vmatprep.subr.mxu0 0.0
    %1513 = vmatpush2.msra.mxu0 0.0
    %1514 = vmatprep.subr.mxu0 0.0
    %1515 = vmatpush2.msra.mxu0 0.0
    %1516 = vmatprep.subr.mxu0 0.0
    %1517 = vmatpush2.msra.mxu0 0.0
    %1518 = vmatprep.subr.mxu0 0.0
    %1519 = vmatpush2.msra.mxu0 0.0
    %1520 = vmatprep.subr.mxu0 0.0
    %1521 = vmatpush2.msra.mxu0 0.0
    %1522 = vmatprep.subr.mxu0 0.0
    %1523 = vmatpush2.msra.mxu0 0.0
    %1524 = vmatprep.subr.mxu0 0.0
    %1525 = vmatpush2.msra.mxu0 0.0
    %1526 = vmatprep.subr.mxu0 0.0
    %1527 = vmatpush2.msra.mxu0 0.0
    %1528 = vmatprep.subr.mxu0 0.0
    %1529 = vmatpush2.msra.mxu0 0.0
    %1530 = vmatprep.subr.mxu0 0.0
    %1531 = vmatpush2.msra.mxu0 0.0
    %1532 = vmatprep.subr.mxu0 0.0
    %1533 = vmatpush2.msra.mxu0 0.0
    %1534 = vmatprep.mubr.f32.mxu0 0.0
    %1535 = vmatmul.mubr.f32.gmra.mxu0 %v1381
    %v1536 = vpop.f32.mrf.mxu0
    %v1537 = vadd.f32 %v1397, %v1536
    %v1538 = vpop.f32.mrf.mxu0
    %v1539 = vadd.f32 %v1398, %v1538
    %1540 = vdwg.mxu0
    %v1541 = vmul.f32 %v1466, 0.5
    %v1542 = vtanh.pop %v1541
    %v1543 = vmul.f32 %v1542, 0.5
    %v1544 = vadd.f32 %v1543, 0.5
    %v1545 = vmul.f32 %v1468, 0.5
    %v1546 = vtanh.pop %v1545
    %v1547 = vmul.f32 %v1546, 0.5
    %v1548 = vadd.f32 %v1547, 0.5
    %v1549 = vtanh.pop %v1537
    %v1550 = vmul.f32 %v1539, 0.5
    %v1551 = vtanh.pop %v1550
    %v1552 = vmul.f32 %v1551, 0.5
    %v1553 = vadd.f32 %v1552, 0.5
    %v1554 = vmul.f32 %v1548, %v1379
    %v1555 = vmul.f32 %v1544, %v1549
    %v1556 = vadd.f32 %v1554, %v1555
    %v1557 = vtanh.pop %v1556
    %v1558 = vmul.f32 %v1553, %v1557
    %s1559 = scalar_lea.vmem [#allocation2], 14
    %1560 = vst [vmem:[%s1559] sm:$0x3] %v1558
    %v1561 = vld [vmem:[#allocation2] sm:$0x3]
    %v1562 = vld [vmem:[#allocation2 + $0x2] sm:$0x3]
    %v1563 = vld [vmem:[#allocation2 + $0x4] sm:$0x3]
    %v1564 = vld [vmem:[#allocation2 + $0x6] sm:$0x3]
    %v1565 = vld [vmem:[#allocation2 + $0x8] sm:$0x3]
    %v1566 = vld [vmem:[#allocation2 + $0xa] sm:$0x3]
    %v1567 = vld [vmem:[#allocation2 + $0xc] sm:$0x3]
    %v1568 = vld [vmem:[#allocation2 + $0xe] sm:$0x3]
    %v1569 = vld [vmem:[%s4] sm:$0x1]
    %v1571 = vlaneseq
    %v1572 = vshrl.u32 %v1571, 7
    %v1573 = vsub.s32 0, %v1572
    %v1574 = vrot.slane %v1569, %v1573
    %v1576 = vmul.f32 %v1561, %v1574
    %v1577 = vmul.f32 %v1562, %v1574
    %v1578 = vmul.f32 %v1563, %v1574
    %v1579 = vmul.f32 %v1564, %v1574
    %v1580 = vmul.f32 %v1565, %v1574
    %v1581 = vmul.f32 %v1566, %v1574
    %v1582 = vmul.f32 %v1567, %v1574
    %v1583 = vmul.f32 %v1568, %v1574
    %vm1584 = vcmask 1041408
    %v1585 = vsel %vm1584, %v1576, 0.0
    %1586 = vadd.xlane.f32.xlu0 %v1585
    %v1587 = vpop.xlane.xlu0 %1586
    %v1588 = vsel %vm1584, %v1577, 0.0
    %1589 = vadd.xlane.f32.xlu0 %v1588
    %v1590 = vpop.xlane.xlu0 %1589
    %v1591 = vsel %vm1584, %v1578, 0.0
    %1592 = vadd.xlane.f32.xlu0 %v1591
    %v1593 = vpop.xlane.xlu0 %1592
    %v1594 = vsel %vm1584, %v1579, 0.0
    %1595 = vadd.xlane.f32.xlu0 %v1594
    %v1596 = vpop.xlane.xlu0 %1595
    %v1597 = vsel %vm1584, %v1580, 0.0
    %1598 = vadd.xlane.f32.xlu0 %v1597
    %v1599 = vpop.xlane.xlu0 %1598
    %v1600 = vsel %vm1584, %v1581, 0.0
    %1601 = vadd.xlane.f32.xlu0 %v1600
    %v1602 = vpop.xlane.xlu0 %1601
    %v1603 = vsel %vm1584, %v1582, 0.0
    %1604 = vadd.xlane.f32.xlu0 %v1603
    %v1605 = vpop.xlane.xlu0 %1604
    %v1606 = vsel %vm1584, %v1583, 0.0
    %1607 = vadd.xlane.f32.xlu0 %v1606
    %v1608 = vpop.xlane.xlu0 %1607
    %v1609 = vld [vmem:[#allocation3] sm:$0x1]
    %v1611 = vlaneseq
    %v1612 = vshrl.u32 %v1611, 7
    %v1613 = vsub.s32 0, %v1612
    %v1614 = vrot.slane %v1609, %v1613
    %1615 = vset.pattern.permute.xlu0 0
    %1616 = vperm.xlu0 %1615, %v1614
    %v1617 = vpop.permute.xlu0 %1616
    %v1619 = vadd.f32 %v1587, %v1617
    %v1620 = vadd.f32 %v1590, %v1617
    %v1621 = vadd.f32 %v1593, %v1617
    %v1622 = vadd.f32 %v1596, %v1617
    %v1623 = vadd.f32 %v1599, %v1617
    %v1624 = vadd.f32 %v1602, %v1617
    %v1625 = vadd.f32 %v1605, %v1617
    %v1626 = vadd.f32 %v1608, %v1617
    %v1635 = vlaneseq
    %v1636 = vand.u32 %v1635, 127
    %v1637 = vlaneseq
    %v1638 = vshrl.u32 %v1637, 7
    %v1639 = vsub.s32 %v1636, %v1638
    %v1640 = vrot.slane %v1619, %v1639
    %v1641 = vlaneseq
    %v1642 = vshrl.u32 %v1641, 7
    %v1643 = vsub.s32 %v1636, %v1642
    %v1644 = vrot.slane %v1620, %v1643
    %v1645 = vlaneseq
    %v1646 = vshrl.u32 %v1645, 7
    %v1647 = vsub.s32 %v1636, %v1646
    %v1648 = vrot.slane %v1621, %v1647
    %v1649 = vlaneseq
    %v1650 = vshrl.u32 %v1649, 7
    %v1651 = vsub.s32 %v1636, %v1650
    %v1652 = vrot.slane %v1622, %v1651
    %v1653 = vlaneseq
    %v1654 = vshrl.u32 %v1653, 7
    %v1655 = vsub.s32 %v1636, %v1654
    %v1656 = vrot.slane %v1623, %v1655
    %v1657 = vlaneseq
    %v1658 = vshrl.u32 %v1657, 7
    %v1659 = vsub.s32 %v1636, %v1658
    %v1660 = vrot.slane %v1624, %v1659
    %v1661 = vlaneseq
    %v1662 = vshrl.u32 %v1661, 7
    %v1663 = vsub.s32 %v1636, %v1662
    %v1664 = vrot.slane %v1625, %v1663
    %v1665 = vlaneseq
    %v1666 = vshrl.u32 %v1665, 7
    %v1667 = vsub.s32 %v1636, %v1666
    %v1668 = vrot.slane %v1626, %v1667
    %vm1669 = vcmask 1041409
    %v1670 = vsel %vm1669, %v1644, %v1640
    %vm1671 = vcmask 1042434
    %v1672 = vsel %vm1671, %v1648, %v1670
    %vm1673 = vcmask 1043459
    %v1674 = vsel %vm1673, %v1652, %v1672
    %vm1675 = vcmask 1044484
    %v1676 = vsel %vm1675, %v1656, %v1674
    %vm1677 = vcmask 1045509
    %v1678 = vsel %vm1677, %v1660, %v1676
    %vm1679 = vcmask 1046534
    %v1680 = vsel %vm1679, %v1664, %v1678
    %vm1681 = vcmask 1047559
    %v1682 = vsel %vm1681, %v1668, %v1680
    %vm1684 = vcmask 15360
    %1685 = vst.msk [vmem:[%s6] sm:$0xff] %vm1684, %v1682
    // Predicated region
    $region30: #{tpu_custom_call.1} parent=1 // pred_check
      _
    $region31: #{tpu_custom_call.1} parent=1 // pred_check_branch
      %1687 = sbr.rel (0) target = $region33
    $region32: #{tpu_custom_call.1} parent=1 // pred_region
      _
    $region33: #{tpu_custom_call.1} parent=1 // pred_fallthru
      _
    // Predicated region
    $region34: #{tpu_custom_call.1} parent=1 // pred_check
      _
    $region35: #{tpu_custom_call.1} parent=1 // pred_check_branch
      %1689 = sbr.rel (0) target = $region37
    $region36: #{tpu_custom_call.1} parent=1 // pred_region
      _
    $region37: #{tpu_custom_call.1} parent=1 // pred_fallthru
      _
    %1690 = vsyncpa [#allocation5], 1

</llo_original>
